<compile_context>
chip_gen: v7x
topology: tpu7x:2x2x1
jax: 0.10.0
libtpu: 0.0.40
codegen_flags: <defaults>
</compile_context>

<pallas_src>
import numpy as np
import jax
import jax.numpy as jnp
from jax.experimental import pallas as pl
from jax.experimental.pallas import tpu as pltpu

BATCH = 8
SEQ_LEN = 8
INPUT_SIZE = 16
HIDDEN_SIZE = 32
NUM_HEADS = 4
PROJ_FACTOR = 2
HEAD_SIZE = HIDDEN_SIZE // NUM_HEADS
S_PROJ = int(HIDDEN_SIZE * PROJ_FACTOR)   # sLSTM up-proj width = 64
M_PROJ = int(INPUT_SIZE * PROJ_FACTOR)    # mLSTM up-proj width = 32
KSIZE = 4                                 # causal conv kernel size
EPS_LN = 1e-5
EPS_GN = 1e-5

# ---------------------------------------------------------------------------
# Packed slab geometry (ONE slab: weights + bias rows).  Every sub-matrix
# starts at column 0 and at a sublane-aligned (multiple-of-8) row, so in-kernel
# static slices are cheap.
# ---------------------------------------------------------------------------
W_ROWS = {                      # name: (row0, nrows, ncols)
    "np":      (0,   32, INPUT_SIZE + M_PROJ + HIDDEN_SIZE),  # fused s_conv + m_up (32,80)
    "s_gates": (32,  64, 4 * HIDDEN_SIZE),                    # [x|xs_conv|h] -> [z|i|f|o]
    "s_up":    (96,  32, 2 * S_PROJ),                         # [up_l | up_r]
    "m_conv":  (128, 32, M_PROJ),
    "m_gates": (160, 64, 7 * HIDDEN_SIZE),                    # [xm_conv|x_left]->[skip|q|k|i|f|v|o]
    "down":    (224, 96, INPUT_SIZE),                         # [s_down ; m_down] (fused avg)
    "gmean":   (320, 32, HIDDEN_SIZE),                        # per-group mean matrix (GroupNorm)
}
B_ROW0 = 352
B_ROWS = {                      # name: (row offset from B_ROW0, length)
    "s_ln_w": (0, 16), "s_ln_b": (1, 16),
    "m_ln_w": (2, 16), "m_ln_b": (3, 16),
    "np_b":   (4, 80),
    "s_gates_b": (5, 128),
    "m_conv_b":  (6, 32),
    "m_gates_b": (7, 224),
    "s_gn_w": (8, 32), "s_gn_b": (9, 32),
    "m_gn_w": (10, 32), "m_gn_b": (11, 32),
    "s_up_b": (12, 128),
    "down_b": (13, 16),
}
SLAB_SHAPE = (368, 224)


# ---------------------------------------------------------------------------
# Raw (un-fused) parameter table — used for init + the pure-JAX reference.
# Linear weights are stored (in, out); kernel computes x @ W + b.
# ---------------------------------------------------------------------------
def _param_defs():
    d = []
    d += [("s_ln_w", (1, INPUT_SIZE)), ("s_ln_b", (1, INPUT_SIZE))]
    d += [("s_conv", (INPUT_SIZE, INPUT_SIZE)), ("s_conv_b", (1, 1))]
    for n in ("z", "i", "f", "o"):
        d += [(f"s_W{n}", (INPUT_SIZE, HIDDEN_SIZE)), (f"s_W{n}_b", (1, HIDDEN_SIZE))]
        d += [(f"s_R{n}", (HIDDEN_SIZE, HIDDEN_SIZE)), (f"s_R{n}_b", (1, HIDDEN_SIZE))]
    d += [("s_gn_w", (1, HIDDEN_SIZE)), ("s_gn_b", (1, HIDDEN_SIZE))]
    d += [("s_up_l", (HIDDEN_SIZE, S_PROJ)), ("s_up_l_b", (1, S_PROJ))]
    d += [("s_up_r", (HIDDEN_SIZE, S_PROJ)), ("s_up_r_b", (1, S_PROJ))]
    d += [("s_down", (S_PROJ, INPUT_SIZE)), ("s_down_b", (1, INPUT_SIZE))]
    d += [("m_ln_w", (1, INPUT_SIZE)), ("m_ln_b", (1, INPUT_SIZE))]
    d += [("m_up_l", (INPUT_SIZE, M_PROJ)), ("m_up_l_b", (1, M_PROJ))]
    d += [("m_up_r", (INPUT_SIZE, HIDDEN_SIZE)), ("m_up_r_b", (1, HIDDEN_SIZE))]
    d += [("m_skip", (M_PROJ, HIDDEN_SIZE)), ("m_skip_b", (1, HIDDEN_SIZE))]
    d += [("m_down", (HIDDEN_SIZE, INPUT_SIZE)), ("m_down_b", (1, INPUT_SIZE))]
    d += [("m_conv", (M_PROJ, M_PROJ)), ("m_conv_b", (1, 1))]
    for n in ("q", "k", "v", "i", "f", "o"):
        d += [(f"m_W{n}", (M_PROJ, HIDDEN_SIZE)), (f"m_W{n}_b", (1, HIDDEN_SIZE))]
    d += [("m_gn_w", (1, HIDDEN_SIZE)), ("m_gn_b", (1, HIDDEN_SIZE))]
    d += [("gmean", (HIDDEN_SIZE, HIDDEN_SIZE))]
    return d


_PARAM_DEFS = _param_defs()


def _causal_conv_matrix(taps, L):
    # Conv1d(1,1,K,padding=K-1) followed by [..., :-(K-1)]  <=> banded causal matmul
    C = np.zeros((L, L), np.float32)
    for t in range(L):
        for j in range(KSIZE):
            s = t - (KSIZE - 1) + j
            if 0 <= s < L:
                C[s, t] = float(taps[j])
    return C


def init_raw_params(key):
    defs = _PARAM_DEFS
    keys = jax.random.split(key, len(defs) + 2)
    params = {}
    for (name, shape), k in zip(defs, keys[:len(defs)]):
        params[name] = 0.1 * jax.random.normal(k, shape, jnp.float32)

    def bd_mask(fin, fout, nb):
        bi, bo = fin // nb, fout // nb
        ii = np.arange(fin)[:, None] // bi
        jj = np.arange(fout)[None, :] // bo
        return jnp.asarray((ii == jj).astype(np.float32))

    mW = bd_mask(INPUT_SIZE, HIDDEN_SIZE, NUM_HEADS)
    mR = bd_mask(HIDDEN_SIZE, HIDDEN_SIZE, NUM_HEADS)
    mQ = bd_mask(M_PROJ, HIDDEN_SIZE, NUM_HEADS)
    for n in ("z", "i", "f", "o"):
        params[f"s_W{n}"] = params[f"s_W{n}"] * mW
        params[f"s_R{n}"] = params[f"s_R{n}"] * mR
    for n in ("q", "k", "v"):
        params[f"m_W{n}"] = params[f"m_W{n}"] * mQ

    s_taps = np.asarray(0.1 * jax.random.normal(keys[-2], (KSIZE,), jnp.float32))
    m_taps = np.asarray(0.1 * jax.random.normal(keys[-1], (KSIZE,), jnp.float32))
    params["s_conv"] = jnp.asarray(_causal_conv_matrix(s_taps, INPUT_SIZE))
    params["m_conv"] = jnp.asarray(_causal_conv_matrix(m_taps, M_PROJ))

    gsz = HIDDEN_SIZE // NUM_HEADS
    gi = np.arange(HIDDEN_SIZE)[:, None] // gsz
    gj = np.arange(HIDDEN_SIZE)[None, :] // gsz
    params["gmean"] = jnp.asarray((gi == gj).astype(np.float32) / gsz)
    return params


# ---------------------------------------------------------------------------
# Host-side packing of raw params into the single slab fed to the kernel.
# ---------------------------------------------------------------------------
def pack_params(p):
    a = lambda v: np.asarray(v, np.float32)
    slab = np.zeros(SLAB_SHAPE, np.float32)

    def put_w(name, mat):
        r0, nr, nc = W_ROWS[name]
        m = a(mat)
        assert m.shape == (nr, nc), (name, m.shape)
        slab[r0:r0 + nr, :nc] = m

    def put_b(name, vec):
        r, n = B_ROWS[name]
        v = a(vec).reshape(-1)
        assert v.shape[0] == n, (name, v.shape)
        slab[B_ROW0 + r, :n] = v

    H, I, P = HIDDEN_SIZE, INPUT_SIZE, M_PROJ

    # ---- LayerNorm affines (stats computed once in-kernel) ----
    put_b("s_ln_w", p["s_ln_w"]); put_b("s_ln_b", p["s_ln_b"])
    put_b("m_ln_w", p["m_ln_w"]); put_b("m_ln_b", p["m_ln_b"])

    # ---- fused block-diagonal projection: [xs_norm | xm_norm] -> [s_conv | m_up_l | m_up_r] ----
    np_w = np.zeros((2 * I, I + P + H), np.float32)
    np_w[0:I, 0:I] = a(p["s_conv"])
    np_w[I:2 * I, I:I + P] = a(p["m_up_l"])
    np_w[I:2 * I, I + P:I + P + H] = a(p["m_up_r"])
    put_w("np", np_w)
    put_b("np_b", np.concatenate(
        [np.full((I,), a(p["s_conv_b"]).reshape(()), np.float32),
         a(p["m_up_l_b"]).reshape(-1), a(p["m_up_r_b"]).reshape(-1)]))

    # ---- sLSTM gates: rows [x | xs_conv | h_prev], cols [z | i | f | o] ----
    rs = np.zeros((2 * I + H, 4 * H), np.float32)
    rs[0:I, 0:H] = a(p["s_Wz"]);      rs[0:I, 3 * H:4 * H] = a(p["s_Wo"])
    rs[I:2 * I, H:2 * H] = a(p["s_Wi"]); rs[I:2 * I, 2 * H:3 * H] = a(p["s_Wf"])
    rs[2 * I:, 0:H] = a(p["s_Rz"]);   rs[2 * I:, H:2 * H] = a(p["s_Ri"])
    rs[2 * I:, 2 * H:3 * H] = a(p["s_Rf"]); rs[2 * I:, 3 * H:4 * H] = a(p["s_Ro"])
    put_w("s_gates", rs)
    put_b("s_gates_b", np.concatenate(
        [a(p["s_Wz_b"]) + a(p["s_Rz_b"]), a(p["s_Wi_b"]) + a(p["s_Ri_b"]),
         a(p["s_Wf_b"]) + a(p["s_Rf_b"]), a(p["s_Wo_b"]) + a(p["s_Ro_b"])], axis=-1))

    put_b("s_gn_w", p["s_gn_w"]); put_b("s_gn_b", p["s_gn_b"])
    put_w("s_up", np.concatenate([a(p["s_up_l"]), a(p["s_up_r"])], axis=1))
    put_b("s_up_b", np.concatenate([a(p["s_up_l_b"]), a(p["s_up_r_b"])], axis=1))

    # ---- mLSTM ----
    put_w("m_conv", p["m_conv"])
    put_b("m_conv_b", np.full((P,), a(p["m_conv_b"]).reshape(()), np.float32))

    inv = np.float32(1.0 / np.sqrt(HEAD_SIZE))        # fold k-scaling at pack time
    rm = np.zeros((2 * P, 7 * H), np.float32)         # rows: xm_conv | x_left
    rm[0:P, 0:H] = a(p["m_skip"]);      rm[0:P, H:2 * H] = a(p["m_Wq"])
    rm[0:P, 2 * H:3 * H] = a(p["m_Wk"]) * inv
    rm[0:P, 3 * H:4 * H] = a(p["m_Wi"]); rm[0:P, 4 * H:5 * H] = a(p["m_Wf"])
    rm[P:, 5 * H:6 * H] = a(p["m_Wv"]); rm[P:, 6 * H:7 * H] = a(p["m_Wo"])
    put_w("m_gates", rm)
    put_b("m_gates_b", np.concatenate(
        [a(p["m_skip_b"]), a(p["m_Wq_b"]), a(p["m_Wk_b"]) * inv,
         a(p["m_Wi_b"]), a(p["m_Wf_b"]), a(p["m_Wv_b"]), a(p["m_Wo_b"])], axis=-1))
    put_b("m_gn_w", p["m_gn_w"]); put_b("m_gn_b", p["m_gn_b"])

    # ---- shared: fused down-projection (produces the branch average) + gmean ----
    put_w("down", np.concatenate([a(p["s_down"]), a(p["m_down"])], axis=0))
    put_b("down_b", a(p["s_down_b"]) + a(p["m_down_b"]))
    put_w("gmean", p["gmean"])

    return jnp.asarray(slab)


# ---------------------------------------------------------------------------
# Shared elementwise helpers (identical numerics in kernel and reference).
# ---------------------------------------------------------------------------
def _silu(x):
    return x * jax.nn.sigmoid(x)


def _layernorm(x, w, b):
    mu = jnp.mean(x, axis=-1, keepdims=True)
    var = jnp.mean(jnp.square(x - mu), axis=-1, keepdims=True)
    return (x - mu) * jax.lax.rsqrt(var + EPS_LN) * w + b


def _gelu_erf(x):
    # Exact (erf-form) GELU via Abramowitz-Stegun 7.1.26 polynomial (|err|<1.5e-7).
    a1, a2, a3, a4, a5 = 0.254829592, -0.284496736, 1.421413741, -1.453152027, 1.061405429
    pp = 0.3275911
    u = x * 0.7071067811865476
    sgn = jnp.where(u >= 0.0, 1.0, -1.0)
    au = jnp.abs(u)
    t = 1.0 / (1.0 + pp * au)
    poly = ((((a5 * t + a4) * t + a3) * t + a2) * t + a1) * t
    erf_u = sgn * (1.0 - poly * jnp.exp(-au * au))
    return 0.5 * x * (1.0 + erf_u)


# ---------------------------------------------------------------------------
# Fused recurrent Pallas kernel.  grid=(T,) "arbitrary"; weights + state carry
# stay VMEM-resident; 7 matmuls per step.
# ---------------------------------------------------------------------------
def xlstm_kernel(x_ref, st0_ref, slab_ref, xout_ref, stout_ref, state_sc):
    H, I, P, B = HIDDEN_SIZE, INPUT_SIZE, M_PROJ, BATCH
    t = pl.program_id(0)

    def wslab(name):
        r0, nr, nc = W_ROWS[name]
        return slab_ref[r0:r0 + nr, 0:nc]

    def bslab(name):
        r, n = B_ROWS[name]
        return slab_ref[B_ROW0 + r:B_ROW0 + r + 1, 0:n]

    mm = lambda a, m: jnp.dot(a, m, preferred_element_type=jnp.float32)

    @pl.when(t == 0)
    def _():
        state_sc[...] = st0_ref[...]

    x = x_ref[...]                              # (B, 16)
    st = state_sc[...]                          # (B, 128)
    h_prev = st[:, 0:H]
    c_prev = st[:, H:2 * H]
    n_prev = st[:, 2 * H:3 * H]
    m_prev = st[:, 3 * H:4 * H]

    # ---- shared LayerNorm stats (both branches normalize the same x) ----
    mu = jnp.mean(x, axis=-1, keepdims=True)
    var = jnp.mean(jnp.square(x - mu), axis=-1, keepdims=True)
    xhat = (x - mu) * jax.lax.rsqrt(var + EPS_LN)
    xs_norm = xhat * bslab("s_ln_w") + bslab("s_ln_b")
    xm_norm = xhat * bslab("m_ln_w") + bslab("m_ln_b")

    # ---- fused block-diagonal proj: s_conv (16->16) and m_up (16->64) ----
    np_out = mm(jnp.concatenate([xs_norm, xm_norm], axis=-1), wslab("np")) + bslab("np_b")
    xs_conv = _silu(np_out[:, 0:I])
    x_left = np_out[:, I:I + P]
    x_right = np_out[:, I + P:I + P + H]

    # --------------------------- sLSTM: recurrence ---------------------------
    lhs_s = jnp.concatenate([x, xs_conv, h_prev], axis=-1)            # (B, 64)
    g_s = mm(lhs_s, wslab("s_gates")) + bslab("s_gates_b")            # (B, 128)
    z = jnp.tanh(g_s[:, 0:H])
    i_til_s = g_s[:, H:2 * H]
    f_til_s = g_s[:, 2 * H:3 * H]
    o_s = jax.nn.sigmoid(g_s[:, 3 * H:4 * H])

    m_s = jnp.maximum(f_til_s + m_prev, i_til_s)
    i_g = jnp.exp(i_til_s - m_s)
    f_g = jnp.exp(f_til_s + m_prev - m_s)
    c_s = f_g * c_prev + i_g * z
    n_s = f_g * n_prev + i_g
    h_s = o_s * c_s / (n_s + 1e-6)                                    # exact divide

    # --------------------------- mLSTM: recurrence ---------------------------
    xm_conv = _silu(mm(x_left, wslab("m_conv")) + bslab("m_conv_b"))
    lhs_m = jnp.concatenate([xm_conv, x_left], axis=-1)               # (B, 64)
    g_m = mm(lhs_m, wslab("m_gates")) + bslab("m_gates_b")            # (B, 224)
    x_skip = g_m[:, 0:H]
    q = g_m[:, H:2 * H]
    k = g_m[:, 2 * H:3 * H]          # 1/sqrt(head_size) folded at pack time
    i_til_m = g_m[:, 3 * H:4 * H]
    f_til_m = g_m[:, 4 * H:5 * H]
    val = g_m[:, 5 * H:6 * H]
    o_m = jax.nn.sigmoid(g_m[:, 6 * H:7 * H])

    m_m = jnp.maximum(f_til_m + m_prev, i_til_m)
    i_g = jnp.exp(i_til_m - m_m)
    f_g = jnp.exp(f_til_m + m_prev - m_m)
    c_m = f_g * c_prev + i_g * (val * k)
    n_m = f_g * n_prev + i_g * k
    denom = jnp.sqrt(jnp.sum(jnp.square(n_m * q), axis=-1, keepdims=True)) + 1e-6
    h_m = o_m * (c_m * q) / denom                                     # exact divide

    # ------------- fused GroupNorm for both branches (one matmul) ------------
    stacked = jnp.concatenate([h_s, h_s * h_s, h_m, h_m * h_m], axis=0)   # (4B, H)
    stats = mm(stacked, wslab("gmean"))                                    # (4B, H)
    mu_s, ex2_s = stats[0:B], stats[B:2 * B]
    mu_m, ex2_m = stats[2 * B:3 * B], stats[3 * B:4 * B]
    var_s = jnp.maximum(ex2_s - mu_s * mu_s, 0.0)       # clamp: no NaN from cancellation
    var_m = jnp.maximum(ex2_m - mu_m * mu_m, 0.0)
    s_gn = (h_s - mu_s) * jax.lax.rsqrt(var_s + EPS_GN) * bslab("s_gn_w") + bslab("s_gn_b")
    m_gn = (h_m - mu_m) * jax.lax.rsqrt(var_m + EPS_GN) * bslab("m_gn_w") + bslab("m_gn_b")

    # -------- branch tails + fused down-projection (= averaged output) -------
    up_s = mm(s_gn, wslab("s_up")) + bslab("s_up_b")                  # (B, 128)
    s_hidden = up_s[:, 0:S_PROJ] * _gelu_erf(up_s[:, S_PROJ:2 * S_PROJ])   # (B, 64)
    m_hidden = (m_gn + x_skip) * _silu(x_right)                       # (B, 32)

    lhs_d = jnp.concatenate([s_hidden, m_hidden], axis=-1)            # (B, 96)
    x_out = 0.5 * (mm(lhs_d, wslab("down")) + bslab("down_b")) + x    # (B, 16)

    new_st = jnp.concatenate([0.5 * (h_s + h_m), 0.5 * (c_s + c_m),
                              0.5 * (n_s + n_m), 0.5 * (m_s + m_m)], axis=-1)

    xout_ref[...] = x_out
    state_sc[...] = new_st

    @pl.when(t == pl.num_programs(0) - 1)
    def _():
        stout_ref[...] = new_st


def _cost_estimate(T):
    macs_step = (BATCH * (32 * 80 + 64 * 128 + 32 * 32 + 64 * 224 + 32 * 128 + 96 * 16)
                 + 4 * BATCH * 32 * 32)
    trans_step = 12 * BATCH * HIDDEN_SIZE
    slab_bytes = SLAB_SHAPE[0] * SLAB_SHAPE[1] * 4
    io_bytes = 2 * T * BATCH * INPUT_SIZE * 4 + 2 * BATCH * 4 * HIDDEN_SIZE * 4
    return pl.CostEstimate(flops=int(2 * macs_step * T),
                           transcendentals=int(trans_step * T),
                           bytes_accessed=int(slab_bytes + io_bytes))


def xlstm_sequence(x_seq, state0, slab):
    """Run the xLSTMBlock recurrently over x_seq[t] (t = 0..T-1) in one kernel."""
    T = x_seq.shape[0]
    st0 = jnp.concatenate(state0, axis=-1)                            # (B, 128)
    out_shape = (
        jax.ShapeDtypeStruct((T, BATCH, INPUT_SIZE), jnp.float32),
        jax.ShapeDtypeStruct((BATCH, 4 * HIDDEN_SIZE), jnp.float32),
    )
    fn = pl.pallas_call(
        xlstm_kernel,
        grid=(T,),
        out_shape=out_shape,
        in_specs=[
            pl.BlockSpec((None, BATCH, INPUT_SIZE), lambda t: (t, 0, 0)),   # per-step x
            pl.BlockSpec((BATCH, 4 * HIDDEN_SIZE), lambda t: (0, 0)),       # initial state (resident)
            pl.BlockSpec(SLAB_SHAPE, lambda t: (0, 0)),                     # weight slab (resident)
        ],
        out_specs=(
            pl.BlockSpec((None, BATCH, INPUT_SIZE), lambda t: (t, 0, 0)),   # per-step x_out
            pl.BlockSpec((BATCH, 4 * HIDDEN_SIZE), lambda t: (0, 0)),       # final state (written once)
        ),
        scratch_shapes=[pltpu.VMEM((BATCH, 4 * HIDDEN_SIZE), jnp.float32)], # state carry
        compiler_params=pltpu.CompilerParams(
            dimension_semantics=("arbitrary",),        # sequential recurrence, cannot be split
            vmem_limit_bytes=4 * 1024 * 1024),
        cost_estimate=_cost_estimate(T),
    )
    x_out_seq, st_out = fn(x_seq, st0, slab)
    H = HIDDEN_SIZE
    new_state = (st_out[:, 0:H], st_out[:, H:2 * H],
                 st_out[:, 2 * H:3 * H], st_out[:, 3 * H:4 * H])
    return x_out_seq, new_state


# ---------------------------------------------------------------------------
# Pure-JAX single-step reference using the RAW (un-fused) parameters —
# validates the Pallas lowering, the host-side weight packing and the in-kernel
# recurrence (the test loops it over T steps).
# ---------------------------------------------------------------------------
def reference_forward(x, state, p):
    h_prev, c_prev, n_prev, m_prev = state
    hp = jax.lax.Precision.HIGHEST

    def linear(v, wk, bk):
        return jnp.dot(v, p[wk], precision=hp) + p[bk]

    def groupnorm(v, wk, bk):
        mu = jnp.dot(v, p["gmean"], precision=hp)
        ex2 = jnp.dot(v * v, p["gmean"], precision=hp)
        var = jnp.maximum(ex2 - mu * mu, 0.0)
        return (v - mu) * jax.lax.rsqrt(var + EPS_GN) * p[wk] + p[bk]

    # sLSTM branch
    xs_norm = _layernorm(x, p["s_ln_w"], p["s_ln_b"])
    xs_conv = _silu(jnp.dot(xs_norm, p["s_conv"], precision=hp) + p["s_conv_b"])
    z = jnp.tanh(linear(x, "s_Wz", "s_Wz_b") + linear(h_prev, "s_Rz", "s_Rz_b"))
    o_s = jax.nn.sigmoid(linear(x, "s_Wo", "s_Wo_b") + linear(h_prev, "s_Ro", "s_Ro_b"))
    i_til = linear(xs_conv, "s_Wi", "s_Wi_b") + linear(h_prev, "s_Ri", "s_Ri_b")
    f_til = linear(xs_conv, "s_Wf", "s_Wf_b") + linear(h_prev, "s_Rf", "s_Rf_b")
    m_s = jnp.maximum(f_til + m_prev, i_til)
    i_g = jnp.exp(i_til - m_s)
    f_g = jnp.exp(f_til + m_prev - m_s)
    c_s = f_g * c_prev + i_g * z
    n_s = f_g * n_prev + i_g
    h_s = o_s * c_s / (n_s + 1e-6)
    s_out = groupnorm(h_s, "s_gn_w", "s_gn_b")
    s_out = linear(s_out, "s_up_l", "s_up_l_b") * _gelu_erf(linear(s_out, "s_up_r", "s_up_r_b"))
    s_out = linear(s_out, "s_down", "s_down_b") + x

    # mLSTM branch
    xm_norm = _layernorm(x, p["m_ln_w"], p["m_ln_b"])
    x_left = linear(xm_norm, "m_up_l", "m_up_l_b")
    x_right = linear(xm_norm, "m_up_r", "m_up_r_b")
    xm_conv = _silu(jnp.dot(x_left, p["m_conv"], precision=hp) + p["m_conv_b"])
    x_skip = linear(xm_conv, "m_skip", "m_skip_b")
    q = linear(xm_conv, "m_Wq", "m_Wq_b")
    k = linear(xm_conv, "m_Wk", "m_Wk_b") * (1.0 / np.sqrt(HEAD_SIZE))
    val = linear(x_left, "m_Wv", "m_Wv_b")
    i_til = linear(xm_conv, "m_Wi", "m_Wi_b")
    f_til = linear(xm_conv, "m_Wf", "m_Wf_b")
    o_m = jax.nn.sigmoid(linear(x_left, "m_Wo", "m_Wo_b"))
    m_m = jnp.maximum(f_til + m_prev, i_til)
    i_g = jnp.exp(i_til - m_m)
    f_g = jnp.exp(f_til + m_prev - m_m)
    c_m = f_g * c_prev + i_g * (val * k)
    n_m = f_g * n_prev + i_g * k
    denom = jnp.sqrt(jnp.sum(jnp.square(n_m * q), axis=-1, keepdims=True)) + 1e-6
    h_m = o_m * (c_m * q) / denom
    m_out = groupnorm(h_m, "m_gn_w", "m_gn_b") + x_skip
    m_out = m_out * _silu(x_right)
    m_out = linear(m_out, "m_down", "m_down_b") + x

    x_out = 0.5 * (s_out + m_out)
    return x_out, (0.5 * (h_s + h_m), 0.5 * (c_s + c_m),
                   0.5 * (n_s + n_m), 0.5 * (m_s + m_m))


if __name__ == "__main__":
    key = jax.random.PRNGKey(0)
    kp, kx, kh, kc, kn, km = jax.random.split(key, 6)
    raw_params = init_raw_params(kp)
    slab = pack_params(raw_params)

    x_seq = jax.random.normal(kx, (SEQ_LEN, BATCH, INPUT_SIZE), jnp.float32)
    h0 = 0.1 * jax.random.normal(kh, (BATCH, HIDDEN_SIZE), jnp.float32)
    c0 = 0.1 * jax.random.normal(kc, (BATCH, HIDDEN_SIZE), jnp.float32)
    n0 = 0.5 + 0.1 * jnp.abs(jax.random.normal(kn, (BATCH, HIDDEN_SIZE), jnp.float32))
    m0 = 0.1 * jax.random.normal(km, (BATCH, HIDDEN_SIZE), jnp.float32)
    state = (h0, c0, n0, m0)

    x_out_seq, new_state = xlstm_sequence(x_seq, state, slab)
    jax.block_until_ready((x_out_seq, new_state))

    # Reference: apply the single-step module forward T times.
    ref_state = state
    ref_outs = []
    for t in range(SEQ_LEN):
        o, ref_state = reference_forward(x_seq[t], ref_state, raw_params)
        ref_outs.append(o)
    ref_outs = jnp.stack(ref_outs, axis=0)

    np.testing.assert_allclose(np.asarray(x_out_seq), np.asarray(ref_outs),
                               rtol=2e-3, atol=2e-3)
    for got, want in zip(new_state, ref_state):
        np.testing.assert_allclose(np.asarray(got), np.asarray(want),
                                   rtol=2e-3, atol=2e-3)

    print("KERNEL_OK")
</pallas_src>

<mosaic_0001>
module attributes {stable_mosaic.version = 11 : i64} {
  func.func @xlstm_kernel(%arg0: i32, %arg1: memref<1x8x16xf32, #tpu.memory_space<vmem>>, %arg2: memref<8x128xf32, #tpu.memory_space<vmem>>, %arg3: memref<368x224xf32, #tpu.memory_space<vmem>>, %arg4: memref<1x8x16xf32, #tpu.memory_space<vmem>>, %arg5: memref<8x128xf32, #tpu.memory_space<vmem>>, %arg6: memref<8x128xf32, #tpu.memory_space<vmem>>) attributes {dimension_semantics = [#tpu.dimension_semantics<arbitrary>], iteration_bounds = array<i64: 8>, scalar_prefetch = 0 : i64, scratch_operands = 1 : i64, tpu.core_type = #tpu.core_type<tc>, window_params = [{transform_indices = @transform_0, window_bounds = array<i64: 1, 8, 16>}, {pipeline_mode = #tpu.pipeline_mode<synchronous>, transform_indices = @transform_1, window_bounds = array<i64: 8, 128>}, {pipeline_mode = #tpu.pipeline_mode<synchronous>, transform_indices = @transform_2, window_bounds = array<i64: 368, 224>}, {transform_indices = @transform_3, window_bounds = array<i64: 1, 8, 16>}, {pipeline_mode = #tpu.pipeline_mode<synchronous>, transform_indices = @transform_4, window_bounds = array<i64: 8, 128>}]} {
    %c0_i32 = arith.constant 0 : i32
    %0 = arith.cmpi eq, %arg0, %c0_i32 : i32
    %1 = arith.extui %0 : i1 to i32
    %c0_i32_0 = arith.constant 0 : i32
    %2 = arith.cmpi ne, %1, %c0_i32_0 : i32
    scf.if %2 {
      %c0_77 = arith.constant 0 : index
      %c0_78 = arith.constant 0 : index
      %266 = vector.load %arg2[%c0_77, %c0_78] : memref<8x128xf32, #tpu.memory_space<vmem>>, vector<8x128xf32>
      %c0_79 = arith.constant 0 : index
      %c0_80 = arith.constant 0 : index
      %267 = vector.load %arg6[%c0_79, %c0_80] : memref<8x128xf32, #tpu.memory_space<vmem>>, vector<8x128xf32>
      tpu.vector_store %arg6[%c0_79, %c0_80], %266 {strides = array<i32>} : memref<8x128xf32, #tpu.memory_space<vmem>>, vector<8x128xf32>,
    } else {
    }
    %c0 = arith.constant 0 : index
    %c0_1 = arith.constant 0 : index
    %c0_2 = arith.constant 0 : index
    %3 = vector.load %arg1[%c0, %c0_1, %c0_2] : memref<1x8x16xf32, #tpu.memory_space<vmem>>, vector<1x8x16xf32>
    %4 = vector.shape_cast %3 : vector<1x8x16xf32> to vector<8x16xf32>
    %c0_3 = arith.constant 0 : index
    %c0_4 = arith.constant 0 : index
    %5 = vector.load %arg6[%c0_3, %c0_4] : memref<8x128xf32, #tpu.memory_space<vmem>>, vector<8x128xf32>
    %6 = vector.extract_strided_slice %5 {offsets = [0, 0], sizes = [8, 32], strides = [1, 1]} : vector<8x128xf32> to vector<8x32xf32>
    %7 = vector.extract_strided_slice %5 {offsets = [0, 32], sizes = [8, 32], strides = [1, 1]} : vector<8x128xf32> to vector<8x32xf32>
    %8 = vector.extract_strided_slice %5 {offsets = [0, 64], sizes = [8, 32], strides = [1, 1]} : vector<8x128xf32> to vector<8x32xf32>
    %9 = vector.extract_strided_slice %5 {offsets = [0, 96], sizes = [8, 32], strides = [1, 1]} : vector<8x128xf32> to vector<8x32xf32>
    %cst = arith.constant dense<0.000000e+00> : vector<8xf32>
    %10 = vector.multi_reduction <add>, %4, %cst [1] : vector<8x16xf32> to vector<8xf32>
    %11 = vector.shape_cast %10 : vector<8xf32> to vector<8x1xf32>
    %cst_5 = arith.constant 1.600000e+01 : f32
    %12 = vector.broadcast %cst_5 : f32 to vector<8x1xf32>
    %13 = arith.divf %11, %12 : vector<8x1xf32>
    %14 = vector.broadcast %13 : vector<8x1xf32> to vector<8x16xf32>
    %15 = arith.subf %4, %14 : vector<8x16xf32>
    %16 = arith.mulf %15, %15 : vector<8x16xf32>
    %cst_6 = arith.constant dense<0.000000e+00> : vector<8xf32>
    %17 = vector.multi_reduction <add>, %16, %cst_6 [1] : vector<8x16xf32> to vector<8xf32>
    %18 = vector.shape_cast %17 : vector<8xf32> to vector<8x1xf32>
    %cst_7 = arith.constant 1.600000e+01 : f32
    %19 = vector.broadcast %cst_7 : f32 to vector<8x1xf32>
    %20 = arith.divf %18, %19 : vector<8x1xf32>
    %21 = vector.broadcast %13 : vector<8x1xf32> to vector<8x16xf32>
    %22 = arith.subf %4, %21 : vector<8x16xf32>
    %cst_8 = arith.constant 9.99999974E-6 : f32
    %23 = vector.broadcast %cst_8 : f32 to vector<8x1xf32>
    %24 = arith.addf %20, %23 : vector<8x1xf32>
    %25 = math.rsqrt %24 : vector<8x1xf32>
    %26 = vector.broadcast %25 : vector<8x1xf32> to vector<8x16xf32>
    %27 = arith.mulf %22, %26 : vector<8x16xf32>
    %c352 = arith.constant 352 : index
    %c0_9 = arith.constant 0 : index
    %28 = vector.load %arg3[%c352, %c0_9] : memref<368x224xf32, #tpu.memory_space<vmem>>, vector<1x16xf32>
    %29 = vector.broadcast %28 : vector<1x16xf32> to vector<8x16xf32>
    %30 = arith.mulf %27, %29 : vector<8x16xf32>
    %c353 = arith.constant 353 : index
    %c0_10 = arith.constant 0 : index
    %31 = vector.load %arg3[%c353, %c0_10] : memref<368x224xf32, #tpu.memory_space<vmem>>, vector<1x16xf32>
    %32 = vector.broadcast %31 : vector<1x16xf32> to vector<8x16xf32>
    %33 = arith.addf %30, %32 : vector<8x16xf32>
    %c354 = arith.constant 354 : index
    %c0_11 = arith.constant 0 : index
    %34 = vector.load %arg3[%c354, %c0_11] : memref<368x224xf32, #tpu.memory_space<vmem>>, vector<1x16xf32>
    %35 = vector.broadcast %34 : vector<1x16xf32> to vector<8x16xf32>
    %36 = arith.mulf %27, %35 : vector<8x16xf32>
    %c355 = arith.constant 355 : index
    %c0_12 = arith.constant 0 : index
    %37 = vector.load %arg3[%c355, %c0_12] : memref<368x224xf32, #tpu.memory_space<vmem>>, vector<1x16xf32>
    %38 = vector.broadcast %37 : vector<1x16xf32> to vector<8x16xf32>
    %39 = arith.addf %36, %38 : vector<8x16xf32>
    %40 = tpu.concatenate %33, %39 in 1 : vector<8x16xf32>, vector<8x16xf32> -> vector<8x32xf32>
    %c0_13 = arith.constant 0 : index
    %c0_14 = arith.constant 0 : index
    %41 = vector.load %arg3[%c0_13, %c0_14] : memref<368x224xf32, #tpu.memory_space<vmem>>, vector<32x80xf32>
    %cst_15 = arith.constant dense<0.000000e+00> : vector<8x80xf32>
    %42 = tpu.matmul %40, %41, %cst_15 {dimension_numbers = #tpu.dot_dimension_numbers<[1], [0], [0], [1], [0, 0, 1, 1], [], []>} : vector<8x32xf32>, vector<32x80xf32>, vector<8x80xf32> -> vector<8x80xf32>
    %c356 = arith.constant 356 : index
    %c0_16 = arith.constant 0 : index
    %43 = vector.load %arg3[%c356, %c0_16] : memref<368x224xf32, #tpu.memory_space<vmem>>, vector<1x80xf32>
    %44 = vector.broadcast %43 : vector<1x80xf32> to vector<8x80xf32>
    %45 = arith.addf %42, %44 : vector<8x80xf32>
    %46 = vector.extract_strided_slice %45 {offsets = [0, 0], sizes = [8, 16], strides = [1, 1]} : vector<8x80xf32> to vector<8x16xf32>
    %47 = arith.negf %46 : vector<8x16xf32>
    %48 = math.exp %47 : vector<8x16xf32>
    %cst_17 = arith.constant 1.000000e+00 : f32
    %49 = vector.broadcast %cst_17 : f32 to vector<8x16xf32>
    %50 = arith.addf %49, %48 : vector<8x16xf32>
    %51 = arith.divf %49, %50 : vector<8x16xf32>
    %52 = arith.mulf %46, %51 : vector<8x16xf32>
    %53 = vector.extract_strided_slice %45 {offsets = [0, 16], sizes = [8, 32], strides = [1, 1]} : vector<8x80xf32> to vector<8x32xf32>
    %54 = vector.extract_strided_slice %45 {offsets = [0, 48], sizes = [8, 32], strides = [1, 1]} : vector<8x80xf32> to vector<8x32xf32>
    %55 = tpu.concatenate %4, %52, %6 in 1 : vector<8x16xf32>, vector<8x16xf32>, vector<8x32xf32> -> vector<8x64xf32>
    %c32 = arith.constant 32 : index
    %c0_18 = arith.constant 0 : index
    %56 = vector.load %arg3[%c32, %c0_18] : memref<368x224xf32, #tpu.memory_space<vmem>>, vector<64x128xf32>
    %cst_19 = arith.constant dense<0.000000e+00> : vector<8x128xf32>
    %57 = tpu.matmul %55, %56, %cst_19 {dimension_numbers = #tpu.dot_dimension_numbers<[1], [0], [0], [1], [0, 0, 1, 1], [], []>} : vector<8x64xf32>, vector<64x128xf32>, vector<8x128xf32> -> vector<8x128xf32>
    %c357 = arith.constant 357 : index
    %c0_20 = arith.constant 0 : index
    %58 = vector.load %arg3[%c357, %c0_20] : memref<368x224xf32, #tpu.memory_space<vmem>>, vector<1x128xf32>
    %59 = vector.broadcast %58 : vector<1x128xf32> to vector<8x128xf32>
    %60 = arith.addf %57, %59 : vector<8x128xf32>
    %61 = vector.extract_strided_slice %60 {offsets = [0, 0], sizes = [8, 32], strides = [1, 1]} : vector<8x128xf32> to vector<8x32xf32>
    %62 = math.tanh %61 : vector<8x32xf32>
    %63 = vector.extract_strided_slice %60 {offsets = [0, 32], sizes = [8, 32], strides = [1, 1]} : vector<8x128xf32> to vector<8x32xf32>
    %64 = vector.extract_strided_slice %60 {offsets = [0, 64], sizes = [8, 32], strides = [1, 1]} : vector<8x128xf32> to vector<8x32xf32>
    %65 = vector.extract_strided_slice %60 {offsets = [0, 96], sizes = [8, 32], strides = [1, 1]} : vector<8x128xf32> to vector<8x32xf32>
    %66 = arith.negf %65 : vector<8x32xf32>
    %67 = math.exp %66 : vector<8x32xf32>
    %cst_21 = arith.constant 1.000000e+00 : f32
    %68 = vector.broadcast %cst_21 : f32 to vector<8x32xf32>
    %69 = arith.addf %68, %67 : vector<8x32xf32>
    %70 = arith.divf %68, %69 : vector<8x32xf32>
    %71 = arith.addf %64, %9 : vector<8x32xf32>
    %72 = arith.maximumf %71, %63 : vector<8x32xf32>
    %73 = arith.subf %63, %72 : vector<8x32xf32>
    %74 = math.exp %73 : vector<8x32xf32>
    %75 = arith.addf %64, %9 : vector<8x32xf32>
    %76 = arith.subf %75, %72 : vector<8x32xf32>
    %77 = math.exp %76 : vector<8x32xf32>
    %78 = arith.mulf %77, %7 : vector<8x32xf32>
    %79 = arith.mulf %74, %62 : vector<8x32xf32>
    %80 = arith.addf %78, %79 : vector<8x32xf32>
    %81 = arith.mulf %77, %8 : vector<8x32xf32>
    %82 = arith.addf %81, %74 : vector<8x32xf32>
    %83 = arith.mulf %70, %80 : vector<8x32xf32>
    %cst_22 = arith.constant 9.99999997E-7 : f32
    %84 = vector.broadcast %cst_22 : f32 to vector<8x32xf32>
    %85 = arith.addf %82, %84 : vector<8x32xf32>
    %86 = arith.divf %83, %85 : vector<8x32xf32>
    %c128 = arith.constant 128 : index
    %c0_23 = arith.constant 0 : index
    %87 = vector.load %arg3[%c128, %c0_23] : memref<368x224xf32, #tpu.memory_space<vmem>>, vector<32x32xf32>
    %cst_24 = arith.constant dense<0.000000e+00> : vector<8x32xf32>
    %88 = tpu.matmul %53, %87, %cst_24 {dimension_numbers = #tpu.dot_dimension_numbers<[1], [0], [0], [1], [0, 0, 1, 1], [], []>} : vector<8x32xf32>, vector<32x32xf32>, vector<8x32xf32> -> vector<8x32xf32>
    %c358 = arith.constant 358 : index
    %c0_25 = arith.constant 0 : index
    %89 = vector.load %arg3[%c358, %c0_25] : memref<368x224xf32, #tpu.memory_space<vmem>>, vector<1x32xf32>
    %90 = vector.broadcast %89 : vector<1x32xf32> to vector<8x32xf32>
    %91 = arith.addf %88, %90 : vector<8x32xf32>
    %92 = arith.negf %91 : vector<8x32xf32>
    %93 = math.exp %92 : vector<8x32xf32>
    %cst_26 = arith.constant 1.000000e+00 : f32
    %94 = vector.broadcast %cst_26 : f32 to vector<8x32xf32>
    %95 = arith.addf %94, %93 : vector<8x32xf32>
    %96 = arith.divf %94, %95 : vector<8x32xf32>
    %97 = arith.mulf %91, %96 : vector<8x32xf32>
    %98 = tpu.concatenate %97, %53 in 1 : vector<8x32xf32>, vector<8x32xf32> -> vector<8x64xf32>
    %c160 = arith.constant 160 : index
    %c0_27 = arith.constant 0 : index
    %99 = vector.load %arg3[%c160, %c0_27] : memref<368x224xf32, #tpu.memory_space<vmem>>, vector<64x224xf32>
    %cst_28 = arith.constant dense<0.000000e+00> : vector<8x224xf32>
    %100 = tpu.matmul %98, %99, %cst_28 {dimension_numbers = #tpu.dot_dimension_numbers<[1], [0], [0], [1], [0, 0, 1, 1], [], []>} : vector<8x64xf32>, vector<64x224xf32>, vector<8x224xf32> -> vector<8x224xf32>
    %c359 = arith.constant 359 : index
    %c0_29 = arith.constant 0 : index
    %101 = vector.load %arg3[%c359, %c0_29] : memref<368x224xf32, #tpu.memory_space<vmem>>, vector<1x224xf32>
    %102 = vector.broadcast %101 : vector<1x224xf32> to vector<8x224xf32>
    %103 = arith.addf %100, %102 : vector<8x224xf32>
    %104 = vector.extract_strided_slice %103 {offsets = [0, 0], sizes = [8, 32], strides = [1, 1]} : vector<8x224xf32> to vector<8x32xf32>
    %105 = vector.extract_strided_slice %103 {offsets = [0, 32], sizes = [8, 32], strides = [1, 1]} : vector<8x224xf32> to vector<8x32xf32>
    %106 = vector.extract_strided_slice %103 {offsets = [0, 64], sizes = [8, 32], strides = [1, 1]} : vector<8x224xf32> to vector<8x32xf32>
    %107 = vector.extract_strided_slice %103 {offsets = [0, 96], sizes = [8, 32], strides = [1, 1]} : vector<8x224xf32> to vector<8x32xf32>
    %108 = vector.extract_strided_slice %103 {offsets = [0, 128], sizes = [8, 32], strides = [1, 1]} : vector<8x224xf32> to vector<8x32xf32>
    %109 = vector.extract_strided_slice %103 {offsets = [0, 160], sizes = [8, 32], strides = [1, 1]} : vector<8x224xf32> to vector<8x32xf32>
    %110 = vector.extract_strided_slice %103 {offsets = [0, 192], sizes = [8, 32], strides = [1, 1]} : vector<8x224xf32> to vector<8x32xf32>
    %111 = arith.negf %110 : vector<8x32xf32>
    %112 = math.exp %111 : vector<8x32xf32>
    %cst_30 = arith.constant 1.000000e+00 : f32
    %113 = vector.broadcast %cst_30 : f32 to vector<8x32xf32>
    %114 = arith.addf %113, %112 : vector<8x32xf32>
    %115 = arith.divf %113, %114 : vector<8x32xf32>
    %116 = arith.addf %108, %9 : vector<8x32xf32>
    %117 = arith.maximumf %116, %107 : vector<8x32xf32>
    %118 = arith.subf %107, %117 : vector<8x32xf32>
    %119 = math.exp %118 : vector<8x32xf32>
    %120 = arith.addf %108, %9 : vector<8x32xf32>
    %121 = arith.subf %120, %117 : vector<8x32xf32>
    %122 = math.exp %121 : vector<8x32xf32>
    %123 = arith.mulf %122, %7 : vector<8x32xf32>
    %124 = arith.mulf %109, %106 : vector<8x32xf32>
    %125 = arith.mulf %119, %124 : vector<8x32xf32>
    %126 = arith.addf %123, %125 : vector<8x32xf32>
    %127 = arith.mulf %122, %8 : vector<8x32xf32>
    %128 = arith.mulf %119, %106 : vector<8x32xf32>
    %129 = arith.addf %127, %128 : vector<8x32xf32>
    %130 = arith.mulf %129, %105 : vector<8x32xf32>
    %131 = arith.mulf %130, %130 : vector<8x32xf32>
    %cst_31 = arith.constant dense<0.000000e+00> : vector<8xf32>
    %132 = vector.multi_reduction <add>, %131, %cst_31 [1] : vector<8x32xf32> to vector<8xf32>
    %133 = vector.shape_cast %132 : vector<8xf32> to vector<8x1xf32>
    %134 = math.sqrt %133 : vector<8x1xf32>
    %cst_32 = arith.constant 9.99999997E-7 : f32
    %135 = vector.broadcast %cst_32 : f32 to vector<8x1xf32>
    %136 = arith.addf %134, %135 : vector<8x1xf32>
    %137 = arith.mulf %126, %105 : vector<8x32xf32>
    %138 = arith.mulf %115, %137 : vector<8x32xf32>
    %139 = vector.broadcast %136 : vector<8x1xf32> to vector<8x32xf32>
    %140 = arith.divf %138, %139 : vector<8x32xf32>
    %141 = arith.mulf %86, %86 : vector<8x32xf32>
    %142 = arith.mulf %140, %140 : vector<8x32xf32>
    %143 = tpu.concatenate %86, %141, %140, %142 in 0 : vector<8x32xf32>, vector<8x32xf32>, vector<8x32xf32>, vector<8x32xf32> -> vector<32x32xf32>
    %c320 = arith.constant 320 : index
    %c0_33 = arith.constant 0 : index
    %144 = vector.load %arg3[%c320, %c0_33] : memref<368x224xf32, #tpu.memory_space<vmem>>, vector<32x32xf32>
    %cst_34 = arith.constant dense<0.000000e+00> : vector<32x32xf32>
    %145 = tpu.matmul %143, %144, %cst_34 {dimension_numbers = #tpu.dot_dimension_numbers<[1], [0], [0], [1], [0, 0, 1, 1], [], []>} : vector<32x32xf32>, vector<32x32xf32>, vector<32x32xf32> -> vector<32x32xf32>
    %146 = vector.extract_strided_slice %145 {offsets = [0, 0], sizes = [8, 32], strides = [1, 1]} : vector<32x32xf32> to vector<8x32xf32>
    %147 = vector.extract_strided_slice %145 {offsets = [8, 0], sizes = [8, 32], strides = [1, 1]} : vector<32x32xf32> to vector<8x32xf32>
    %148 = vector.extract_strided_slice %145 {offsets = [16, 0], sizes = [8, 32], strides = [1, 1]} : vector<32x32xf32> to vector<8x32xf32>
    %149 = vector.extract_strided_slice %145 {offsets = [24, 0], sizes = [8, 32], strides = [1, 1]} : vector<32x32xf32> to vector<8x32xf32>
    %150 = arith.mulf %146, %146 : vector<8x32xf32>
    %151 = arith.subf %147, %150 : vector<8x32xf32>
    %cst_35 = arith.constant 0.000000e+00 : f32
    %152 = vector.broadcast %cst_35 : f32 to vector<8x32xf32>
    %153 = arith.maximumf %151, %152 : vector<8x32xf32>
    %154 = arith.mulf %148, %148 : vector<8x32xf32>
    %155 = arith.subf %149, %154 : vector<8x32xf32>
    %cst_36 = arith.constant 0.000000e+00 : f32
    %156 = vector.broadcast %cst_36 : f32 to vector<8x32xf32>
    %157 = arith.maximumf %155, %156 : vector<8x32xf32>
    %158 = arith.subf %86, %146 : vector<8x32xf32>
    %cst_37 = arith.constant 9.99999974E-6 : f32
    %159 = vector.broadcast %cst_37 : f32 to vector<8x32xf32>
    %160 = arith.addf %153, %159 : vector<8x32xf32>
    %161 = math.rsqrt %160 : vector<8x32xf32>
    %162 = arith.mulf %158, %161 : vector<8x32xf32>
    %c360 = arith.constant 360 : index
    %c0_38 = arith.constant 0 : index
    %163 = vector.load %arg3[%c360, %c0_38] : memref<368x224xf32, #tpu.memory_space<vmem>>, vector<1x32xf32>
    %164 = vector.broadcast %163 : vector<1x32xf32> to vector<8x32xf32>
    %165 = arith.mulf %162, %164 : vector<8x32xf32>
    %c361 = arith.constant 361 : index
    %c0_39 = arith.constant 0 : index
    %166 = vector.load %arg3[%c361, %c0_39] : memref<368x224xf32, #tpu.memory_space<vmem>>, vector<1x32xf32>
    %167 = vector.broadcast %166 : vector<1x32xf32> to vector<8x32xf32>
    %168 = arith.addf %165, %167 : vector<8x32xf32>
    %169 = arith.subf %140, %148 : vector<8x32xf32>
    %cst_40 = arith.constant 9.99999974E-6 : f32
    %170 = vector.broadcast %cst_40 : f32 to vector<8x32xf32>
    %171 = arith.addf %157, %170 : vector<8x32xf32>
    %172 = math.rsqrt %171 : vector<8x32xf32>
    %173 = arith.mulf %169, %172 : vector<8x32xf32>
    %c362 = arith.constant 362 : index
    %c0_41 = arith.constant 0 : index
    %174 = vector.load %arg3[%c362, %c0_41] : memref<368x224xf32, #tpu.memory_space<vmem>>, vector<1x32xf32>
    %175 = vector.broadcast %174 : vector<1x32xf32> to vector<8x32xf32>
    %176 = arith.mulf %173, %175 : vector<8x32xf32>
    %c363 = arith.constant 363 : index
    %c0_42 = arith.constant 0 : index
    %177 = vector.load %arg3[%c363, %c0_42] : memref<368x224xf32, #tpu.memory_space<vmem>>, vector<1x32xf32>
    %178 = vector.broadcast %177 : vector<1x32xf32> to vector<8x32xf32>
    %179 = arith.addf %176, %178 : vector<8x32xf32>
    %c96 = arith.constant 96 : index
    %c0_43 = arith.constant 0 : index
    %180 = vector.load %arg3[%c96, %c0_43] : memref<368x224xf32, #tpu.memory_space<vmem>>, vector<32x128xf32>
    %cst_44 = arith.constant dense<0.000000e+00> : vector<8x128xf32>
    %181 = tpu.matmul %168, %180, %cst_44 {dimension_numbers = #tpu.dot_dimension_numbers<[1], [0], [0], [1], [0, 0, 1, 1], [], []>} : vector<8x32xf32>, vector<32x128xf32>, vector<8x128xf32> -> vector<8x128xf32>
    %c364 = arith.constant 364 : index
    %c0_45 = arith.constant 0 : index
    %182 = vector.load %arg3[%c364, %c0_45] : memref<368x224xf32, #tpu.memory_space<vmem>>, vector<1x128xf32>
    %183 = vector.broadcast %182 : vector<1x128xf32> to vector<8x128xf32>
    %184 = arith.addf %181, %183 : vector<8x128xf32>
    %185 = vector.extract_strided_slice %184 {offsets = [0, 0], sizes = [8, 64], strides = [1, 1]} : vector<8x128xf32> to vector<8x64xf32>
    %186 = vector.extract_strided_slice %184 {offsets = [0, 64], sizes = [8, 64], strides = [1, 1]} : vector<8x128xf32> to vector<8x64xf32>
    %cst_46 = arith.constant 0.707106769 : f32
    %187 = vector.broadcast %cst_46 : f32 to vector<8x64xf32>
    %188 = arith.mulf %186, %187 : vector<8x64xf32>
    %cst_47 = arith.constant 0.000000e+00 : f32
    %189 = vector.broadcast %cst_47 : f32 to vector<8x64xf32>
    %190 = arith.cmpf oge, %188, %189 : vector<8x64xf32>
    %cst_48 = arith.constant 1.000000e+00 : f32
    %cst_49 = arith.constant -1.000000e+00 : f32
    %191 = vector.broadcast %cst_48 : f32 to vector<8x64xf32>
    %192 = vector.broadcast %cst_49 : f32 to vector<8x64xf32>
    %193 = arith.select %190, %191, %192 : vector<8x64xi1>, vector<8x64xf32>
    %194 = math.absf %188 : vector<8x64xf32>
    %cst_50 = arith.constant 0.327591091 : f32
    %195 = vector.broadcast %cst_50 : f32 to vector<8x64xf32>
    %196 = arith.mulf %195, %194 : vector<8x64xf32>
    %cst_51 = arith.constant 1.000000e+00 : f32
    %197 = vector.broadcast %cst_51 : f32 to vector<8x64xf32>
    %198 = arith.addf %197, %196 : vector<8x64xf32>
    %cst_52 = arith.constant 1.000000e+00 : f32
    %199 = vector.broadcast %cst_52 : f32 to vector<8x64xf32>
    %200 = arith.divf %199, %198 : vector<8x64xf32>
    %cst_53 = arith.constant 1.06140542 : f32
    %201 = vector.broadcast %cst_53 : f32 to vector<8x64xf32>
    %202 = arith.mulf %201, %200 : vector<8x64xf32>
    %cst_54 = arith.constant -1.45315206 : f32
    %203 = vector.broadcast %cst_54 : f32 to vector<8x64xf32>
    %204 = arith.addf %202, %203 : vector<8x64xf32>
    %205 = arith.mulf %204, %200 : vector<8x64xf32>
    %cst_55 = arith.constant 1.42141378 : f32
    %206 = vector.broadcast %cst_55 : f32 to vector<8x64xf32>
    %207 = arith.addf %205, %206 : vector<8x64xf32>
    %208 = arith.mulf %207, %200 : vector<8x64xf32>
    %cst_56 = arith.constant -0.284496725 : f32
    %209 = vector.broadcast %cst_56 : f32 to vector<8x64xf32>
    %210 = arith.addf %208, %209 : vector<8x64xf32>
    %211 = arith.mulf %210, %200 : vector<8x64xf32>
    %cst_57 = arith.constant 0.254829586 : f32
    %212 = vector.broadcast %cst_57 : f32 to vector<8x64xf32>
    %213 = arith.addf %211, %212 : vector<8x64xf32>
    %214 = arith.mulf %213, %200 : vector<8x64xf32>
    %cst_58 = arith.constant 0.000000e+00 : f32
    %215 = vector.broadcast %cst_58 : f32 to vector<8x64xf32>
    %216 = arith.subf %215, %194 : vector<8x64xf32>
    %217 = arith.mulf %216, %194 : vector<8x64xf32>
    %218 = math.exp %217 : vector<8x64xf32>
    %219 = arith.mulf %214, %218 : vector<8x64xf32>
    %cst_59 = arith.constant 1.000000e+00 : f32
    %220 = vector.broadcast %cst_59 : f32 to vector<8x64xf32>
    %221 = arith.subf %220, %219 : vector<8x64xf32>
    %222 = arith.mulf %193, %221 : vector<8x64xf32>
    %cst_60 = arith.constant 5.000000e-01 : f32
    %223 = vector.broadcast %cst_60 : f32 to vector<8x64xf32>
    %224 = arith.mulf %223, %186 : vector<8x64xf32>
    %cst_61 = arith.constant 1.000000e+00 : f32
    %225 = vector.broadcast %cst_61 : f32 to vector<8x64xf32>
    %226 = arith.addf %225, %222 : vector<8x64xf32>
    %227 = arith.mulf %224, %226 : vector<8x64xf32>
    %228 = arith.mulf %185, %227 : vector<8x64xf32>
    %229 = arith.addf %179, %104 : vector<8x32xf32>
    %230 = arith.negf %54 : vector<8x32xf32>
    %231 = math.exp %230 : vector<8x32xf32>
    %cst_62 = arith.constant 1.000000e+00 : f32
    %232 = vector.broadcast %cst_62 : f32 to vector<8x32xf32>
    %233 = arith.addf %232, %231 : vector<8x32xf32>
    %234 = arith.divf %232, %233 : vector<8x32xf32>
    %235 = arith.mulf %54, %234 : vector<8x32xf32>
    %236 = arith.mulf %229, %235 : vector<8x32xf32>
    %237 = tpu.concatenate %228, %236 in 1 : vector<8x64xf32>, vector<8x32xf32> -> vector<8x96xf32>
    %c224 = arith.constant 224 : index
    %c0_63 = arith.constant 0 : index
    %238 = vector.load %arg3[%c224, %c0_63] : memref<368x224xf32, #tpu.memory_space<vmem>>, vector<96x16xf32>
    %cst_64 = arith.constant dense<0.000000e+00> : vector<8x16xf32>
    %239 = tpu.matmul %237, %238, %cst_64 {dimension_numbers = #tpu.dot_dimension_numbers<[1], [0], [0], [1], [0, 0, 1, 1], [], []>} : vector<8x96xf32>, vector<96x16xf32>, vector<8x16xf32> -> vector<8x16xf32>
    %c365 = arith.constant 365 : index
    %c0_65 = arith.constant 0 : index
    %240 = vector.load %arg3[%c365, %c0_65] : memref<368x224xf32, #tpu.memory_space<vmem>>, vector<1x16xf32>
    %241 = vector.broadcast %240 : vector<1x16xf32> to vector<8x16xf32>
    %242 = arith.addf %239, %241 : vector<8x16xf32>
    %cst_66 = arith.constant 5.000000e-01 : f32
    %243 = vector.broadcast %cst_66 : f32 to vector<8x16xf32>
    %244 = arith.mulf %243, %242 : vector<8x16xf32>
    %245 = arith.addf %244, %4 : vector<8x16xf32>
    %246 = arith.addf %86, %140 : vector<8x32xf32>
    %cst_67 = arith.constant 5.000000e-01 : f32
    %247 = vector.broadcast %cst_67 : f32 to vector<8x32xf32>
    %248 = arith.mulf %247, %246 : vector<8x32xf32>
    %249 = arith.addf %80, %126 : vector<8x32xf32>
    %cst_68 = arith.constant 5.000000e-01 : f32
    %250 = vector.broadcast %cst_68 : f32 to vector<8x32xf32>
    %251 = arith.mulf %250, %249 : vector<8x32xf32>
    %252 = arith.addf %82, %129 : vector<8x32xf32>
    %cst_69 = arith.constant 5.000000e-01 : f32
    %253 = vector.broadcast %cst_69 : f32 to vector<8x32xf32>
    %254 = arith.mulf %253, %252 : vector<8x32xf32>
    %255 = arith.addf %72, %117 : vector<8x32xf32>
    %cst_70 = arith.constant 5.000000e-01 : f32
    %256 = vector.broadcast %cst_70 : f32 to vector<8x32xf32>
    %257 = arith.mulf %256, %255 : vector<8x32xf32>
    %258 = tpu.concatenate %248, %251, %254, %257 in 1 : vector<8x32xf32>, vector<8x32xf32>, vector<8x32xf32>, vector<8x32xf32> -> vector<8x128xf32>
    %c0_71 = arith.constant 0 : index
    %c0_72 = arith.constant 0 : index
    %c0_73 = arith.constant 0 : index
    %259 = vector.load %arg4[%c0_71, %c0_72, %c0_73] : memref<1x8x16xf32, #tpu.memory_space<vmem>>, vector<1x8x16xf32>
    %260 = vector.shape_cast %259 : vector<1x8x16xf32> to vector<8x16xf32>
    %261 = vector.shape_cast %245 : vector<8x16xf32> to vector<1x8x16xf32>
    tpu.vector_store %arg4[%c0_71, %c0_72, %c0_73], %261 {strides = array<i32>} : memref<1x8x16xf32, #tpu.memory_space<vmem>>, vector<1x8x16xf32>,
    %c0_74 = arith.constant 0 : index
    %c0_75 = arith.constant 0 : index
    %262 = vector.load %arg6[%c0_74, %c0_75] : memref<8x128xf32, #tpu.memory_space<vmem>>, vector<8x128xf32>
    tpu.vector_store %arg6[%c0_74, %c0_75], %258 {strides = array<i32>} : memref<8x128xf32, #tpu.memory_space<vmem>>, vector<8x128xf32>,
    %c7_i32 = arith.constant 7 : i32
    %263 = arith.cmpi eq, %arg0, %c7_i32 : i32
    %264 = arith.extui %263 : i1 to i32
    %c0_i32_76 = arith.constant 0 : i32
    %265 = arith.cmpi ne, %264, %c0_i32_76 : i32
    scf.if %265 {
      %c0_77 = arith.constant 0 : index
      %c0_78 = arith.constant 0 : index
      %266 = vector.load %arg5[%c0_77, %c0_78] : memref<8x128xf32, #tpu.memory_space<vmem>>, vector<8x128xf32>
      tpu.vector_store %arg5[%c0_77, %c0_78], %258 {strides = array<i32>} : memref<8x128xf32, #tpu.memory_space<vmem>>, vector<8x128xf32>,
    } else {
    }
    return
  }
  func.func @transform_0(%arg0: i32) -> (i32, i32, i32) {
    %c0_i32 = arith.constant 0 : i32
    %c0_i32_0 = arith.constant 0 : i32
    %c0_i32_1 = arith.constant 0 : i32
    return %arg0, %c0_i32, %c0_i32_0 : i32, i32, i32
  }
  func.func @transform_1(%arg0: i32) -> (i32, i32) {
    %c0_i32 = arith.constant 0 : i32
    %c0_i32_0 = arith.constant 0 : i32
    %c0_i32_1 = arith.constant 0 : i32
    return %c0_i32, %c0_i32_0 : i32, i32
  }
  func.func @transform_2(%arg0: i32) -> (i32, i32) {
    %c0_i32 = arith.constant 0 : i32
    %c0_i32_0 = arith.constant 0 : i32
    %c0_i32_1 = arith.constant 0 : i32
    return %c0_i32, %c0_i32_0 : i32, i32
  }
  func.func @transform_3(%arg0: i32) -> (i32, i32, i32) {
    %c0_i32 = arith.constant 0 : i32
    %c0_i32_0 = arith.constant 0 : i32
    %c0_i32_1 = arith.constant 0 : i32
    return %arg0, %c0_i32, %c0_i32_0 : i32, i32, i32
  }
  func.func @transform_4(%arg0: i32) -> (i32, i32) {
    %c0_i32 = arith.constant 0 : i32
    %c0_i32_0 = arith.constant 0 : i32
    %c0_i32_1 = arith.constant 0 : i32
    return %c0_i32, %c0_i32_0 : i32, i32
  }
}

</mosaic_0001>

<llo_original>
// kernel: tpu_custom_call.1
$region0: #{tpu_custom_call.1}
  #allocation0 [shape = 'u32[]', space=smem, size = 0x4, offset = 0x4, fixed_abs, tag = 'smem constant byte address 0x4 - core index']
  #allocation1 [shape = 'u32[144,128]{1,0:T(1,128)}', space=vmem, size = 0x12000, scoped, tag = 'internal scratch']
  #allocation2 [shape = 'f32[8,128]{1,0:T(8,128)}', space=vmem, size = 0x1000, scoped, tag = 'scratch operand']
  %s0 = inlined_call_operand.vmem [shape: f32[8,8,16], index: 0, kind: input, shape index: {}]
  %s1 = inlined_call_operand.vmem [shape: f32[8,128], index: 1, kind: input, shape index: {}]
  %s2 = inlined_call_operand.vmem [shape: f32[368,224], index: 2, kind: input, shape index: {}]
  %s3 = inlined_call_operand.hbm [shape: f32[8,8,16], index: 3, kind: output, shape index: {0}]
  %s4 = inlined_call_operand.hbm [shape: f32[8,128], index: 4, kind: output, shape index: {1}]
  %5 = xla_tuple %s3, %s4
  %s6 = sld [smem:[#allocation0]]
  $region61: #{tpu_custom_call.1} parent=0
    _
  %s8 = ssub.s32 1, %s6
  %s9 = scalar_select 0, %s8, %s6
  $region1: #{tpu_custom_call.1} parent=0
    #allocation3 [shape = 'u8[8192]{0}', space=vmem, size = 0x2000, scoped, tag = 'output window, operand 0']
    #allocation4 [shape = 's32[2]{0}', space=sflag, size = 0x8, scoped, tag = 'scoped memory for tpu_custom_call.1']
    #allocation5 [shape = 'u8[4096]{0}', space=vmem, size = 0x1000, scoped, tag = 'output window, operand 1, single buffered']
    #allocation6 [shape = 's32[1]{0}', space=sflag, size = 0x4, scoped, tag = 'scoped memory for tpu_custom_call.1']
    %10 = vsyncpa [#allocation4], 0
    %s11 = scalar_lea.sflag [#allocation4], 1
    %12 = vsyncpa %s11, 0
    %13 = vsyncpa [#allocation6], 0
    loop: start=0, step=1, limit=10
    $region2: #{tpu_custom_call.1} parent=1 // loop_pre_header
      _
    $region3: #{tpu_custom_call.1} parent=1 // loop_header
      %s15 = sphi 0, %s19
      %p16 = scmp.ge.s32.totalorder %s15, 10
      %s25 = sphi 0, %s27
      %s28 = sphi 0, %s25
      %s29 = sphi 0, %s28
      %s45 = sphi 0, %s29
      %s49 = sphi 0, %s49
      %s51 = sphi 0, %s49
      %s52 = sphi 0, %s51
      %s66 = sphi 0, %s52
      %s70 = sphi 0, %s70
      %s72 = sphi 0, %s70
      %s73 = sphi 0, %s72
      %s87 = sphi 0, %s73
      %s93 = sphi 0, %s95
      %s96 = sphi 0, %s93
      %s97 = sphi 0, %s96
      %s113 = sphi 0, %s97
      %s117 = sphi 0, %s117
      %s119 = sphi 0, %s117
      %s120 = sphi 0, %s119
      %s134 = sphi 0, %s120
    $region4: #{tpu_custom_call.1} parent=1 // loop_header_branch
      %18 = sbr.rel (%p16) target = $region8
    $region5: #{tpu_custom_call.1} parent=1 // loop_body
      %s20 = ssub.s32 %s15, 1
      %s21 = ssub.s32 %s15, 2
      %s22 = sadd.s32 %s15, 1
      %s23 = ssub.s32 %s15, %s22
      %p24 = scmp.eq.s32.totalorder %s23, 0
      %s26 = sadd.s32 %s25, 1
      %s27 = scalar_select %p24, %s25, %s26
      %p30 = pneg %p24
      %p31 = scmp.eq.s32.totalorder %s15, 7
      %p32 = por %p30, %p31
      %p33 = scmp.ne.s32.totalorder %s25, %s28
      %p34 = scmp.eq.s32.totalorder %s15, 0
      %p35 = por %p33, %p34
      %p36 = scmp.ne.s32.totalorder %s25, %s28
      %p37 = scmp.eq.s32.totalorder %s20, 7
      %p38 = por %p36, %p37
      %p39 = scmp.ne.s32.totalorder %s28, %s29
      %p40 = scmp.eq.s32.totalorder %s20, 0
      %p41 = por %p39, %p40
      %p42 = scmp.ne.s32.totalorder %s28, %s29
      %p43 = scmp.eq.s32.totalorder %s21, 7
      %p44 = por %p42, %p43
      %p46 = scmp.ne.s32.totalorder %s29, %s45
      %p47 = scmp.eq.s32.totalorder %s21, 0
      %p48 = por %p46, %p47
      %s50 = sadd.s32 %s49, 1
      %p53 = scmp.eq.s32.totalorder %s15, 7
      %p54 = scmp.ne.s32.totalorder %s49, %s51
      %p55 = scmp.eq.s32.totalorder %s15, 0
      %p56 = por %p54, %p55
      %p57 = scmp.ne.s32.totalorder %s49, %s51
      %p58 = scmp.eq.s32.totalorder %s20, 7
      %p59 = por %p57, %p58
      %p60 = scmp.ne.s32.totalorder %s51, %s52
      %p61 = scmp.eq.s32.totalorder %s20, 0
      %p62 = por %p60, %p61
      %p63 = scmp.ne.s32.totalorder %s51, %s52
      %p64 = scmp.eq.s32.totalorder %s21, 7
      %p65 = por %p63, %p64
      %p67 = scmp.ne.s32.totalorder %s52, %s66
      %p68 = scmp.eq.s32.totalorder %s21, 0
      %p69 = por %p67, %p68
      %s71 = sadd.s32 %s70, 1
      %p74 = scmp.eq.s32.totalorder %s15, 7
      %p75 = scmp.ne.s32.totalorder %s70, %s72
      %p76 = scmp.eq.s32.totalorder %s15, 0
      %p77 = por %p75, %p76
      %p78 = scmp.ne.s32.totalorder %s70, %s72
      %p79 = scmp.eq.s32.totalorder %s20, 7
      %p80 = por %p78, %p79
      %p81 = scmp.ne.s32.totalorder %s72, %s73
      %p82 = scmp.eq.s32.totalorder %s20, 0
      %p83 = por %p81, %p82
      %p84 = scmp.ne.s32.totalorder %s72, %s73
      %p85 = scmp.eq.s32.totalorder %s21, 7
      %p86 = por %p84, %p85
      %p88 = scmp.ne.s32.totalorder %s73, %s87
      %p89 = scmp.eq.s32.totalorder %s21, 0
      %p90 = por %p88, %p89
      %s91 = ssub.s32 %s15, %s22
      %p92 = scmp.eq.s32.totalorder %s91, 0
      %s94 = sadd.s32 %s93, 1
      %s95 = scalar_select %p92, %s93, %s94
      %p98 = pneg %p92
      %p99 = scmp.eq.s32.totalorder %s15, 7
      %p100 = por %p98, %p99
      %p101 = scmp.ne.s32.totalorder %s93, %s96
      %p102 = scmp.eq.s32.totalorder %s15, 0
      %p103 = por %p101, %p102
      %p104 = scmp.ne.s32.totalorder %s93, %s96
      %p105 = scmp.eq.s32.totalorder %s20, 7
      %p106 = por %p104, %p105
      %p107 = scmp.ne.s32.totalorder %s96, %s97
      %p108 = scmp.eq.s32.totalorder %s20, 0
      %p109 = por %p107, %p108
      %p110 = scmp.ne.s32.totalorder %s96, %s97
      %p111 = scmp.eq.s32.totalorder %s21, 7
      %p112 = por %p110, %p111
      %p114 = scmp.ne.s32.totalorder %s97, %s113
      %p115 = scmp.eq.s32.totalorder %s21, 0
      %p116 = por %p114, %p115
      %s118 = sadd.s32 %s117, 1
      %p121 = scmp.eq.s32.totalorder %s15, 7
      %p122 = scmp.ne.s32.totalorder %s117, %s119
      %p123 = scmp.eq.s32.totalorder %s15, 0
      %p124 = por %p122, %p123
      %p125 = scmp.ne.s32.totalorder %s117, %s119
      %p126 = scmp.eq.s32.totalorder %s20, 7
      %p127 = por %p125, %p126
      %p128 = scmp.ne.s32.totalorder %s119, %s120
      %p129 = scmp.eq.s32.totalorder %s20, 0
      %p130 = por %p128, %p129
      %p131 = scmp.ne.s32.totalorder %s119, %s120
      %p132 = scmp.eq.s32.totalorder %s21, 7
      %p133 = por %p131, %p132
      %p135 = scmp.ne.s32.totalorder %s120, %s134
      %p136 = scmp.eq.s32.totalorder %s21, 0
      %p137 = por %p135, %p136
      %p138 = scmp.le.s32.totalorder 1, %s15
      %p139 = scmp.lt.s32.totalorder %s15, 9
      %p140 = pnand %p138, %p139
      %p141 = pneg %p140
      // Predicated region
      $region9: #{tpu_custom_call.1} parent=5 // pred_check
        _
      $region10: #{tpu_custom_call.1} parent=5 // pred_check_branch
        %143 = sbr.rel (%p140) target = $region12
      $region11: #{tpu_custom_call.1} parent=5 // pred_region
        %s144 = ssub.s32 %s15, 1
        // Predicated region
        $region13: #{tpu_custom_call.1} parent=11 // pred_check
          %p145 = pneg %p62
        $region14: #{tpu_custom_call.1} parent=11 // pred_check_branch
          %147 = sbr.rel (%p145) target = $region16
        $region15: #{tpu_custom_call.1} parent=11 // pred_region
          _
        $region16: #{tpu_custom_call.1} parent=11 // pred_fallthru
          _
        // Predicated region
        $region17: #{tpu_custom_call.1} parent=11 // pred_check
          %p148 = pneg %p83
        $region18: #{tpu_custom_call.1} parent=11 // pred_check_branch
          %150 = sbr.rel (%p148) target = $region20
        $region19: #{tpu_custom_call.1} parent=11 // pred_region
          _
        $region20: #{tpu_custom_call.1} parent=11 // pred_fallthru
          _
      $region12: #{tpu_custom_call.1} parent=5 // pred_fallthru
        _
      %p151 = scmp.lt.s32.totalorder %s15, 8
      // Predicated region
      $region21: #{tpu_custom_call.1} parent=5 // pred_check
        %p152 = pneg %p151
      $region22: #{tpu_custom_call.1} parent=5 // pred_check_branch
        %154 = sbr.rel (%p152) target = $region24
      $region23: #{tpu_custom_call.1} parent=5 // pred_region
        // Predicated region
        $region25: #{tpu_custom_call.1} parent=23 // pred_check
          %p155 = pneg %p35
        $region26: #{tpu_custom_call.1} parent=23 // pred_check_branch
          %157 = sbr.rel (%p155) target = $region28
        $region27: #{tpu_custom_call.1} parent=23 // pred_region
          %p158 = scmp.lt.s32.totalorder %s15, 7
          %s159 = scalar_select %p158, %s15, 7
          %s160 = smul.addr %s159, 8
          %s161 = scalar_lea.vmem %s0, %s160
        $region28: #{tpu_custom_call.1} parent=23 // pred_fallthru
          _
      $region24: #{tpu_custom_call.1} parent=5 // pred_fallthru
        _
      %p162 = scmp.le.s32.totalorder 1, %s15
      %p163 = scmp.lt.s32.totalorder %s15, 9
      %p164 = pnand %p162, %p163
      %p165 = pneg %p164
      // Predicated region
      $region29: #{tpu_custom_call.1} parent=5 // pred_check
        _
      $region30: #{tpu_custom_call.1} parent=5 // pred_check_branch
        %167 = sbr.rel (%p164) target = $region32
      $region31: #{tpu_custom_call.1} parent=5 // pred_region
        %s168 = ssub.s32 %s15, 1
        %p169 = scmp.lt.s32.totalorder %s20, 7
        %s170 = scalar_select %p169, %s20, 7
        %s171 = smul.addr %s170, 8
        %s172 = scalar_lea.vmem %s0, %s171
        %p173 = pneg %p41
        %p174 = pneg %p38
        %p175 = pneg %p62
        %p176 = pneg %p59
        %p177 = pneg %p83
        %p178 = pneg %p80
        %p179 = pneg %p109
        %p180 = pneg %p106
        %s181 = sand.u32 %s96, 1
        %s182 = scalar_lea.sflag [#allocation4], %s181
        %s183 = sand.u32 %s96, 1
        %s184 = smul.addr %s183, 8
        %s185 = scalar_lea.vmem [#allocation3], %s184
        %p186 = pneg %p130
        %p187 = pneg %p127
        %p188 = scmp.lt.s32.totalorder %s20, 7
        %s189 = scalar_select %p188, %s20, 7
        %s190 = smul.addr %s189, 8
        %s191 = scalar_lea.vmem %s0, %s190
        %p192 = scmp.eq.s32.totalorder %s20, 0
        // Predicated region
        $region33: #{tpu_custom_call.1} parent=31 // pred_check
          %p193 = pneg %p192
        $region34: #{tpu_custom_call.1} parent=31 // pred_check_branch
          %195 = sbr.rel (%p193) target = $region36
        $region35: #{tpu_custom_call.1} parent=31 // pred_region
          %v196 = vld [vmem:[%s1] sm:$0xff]
          %197 = vst [vmem:[#allocation2] sm:$0xff] %v196
        $region36: #{tpu_custom_call.1} parent=31 // pred_fallthru
          _
        %v198 = vld [vmem:[%s191] sm:$0xff]
        %v199 = vld [vmem:[#allocation2] sm:$0xff]
        %vm200 = vcmask 130048
        %v201 = vsel %vm200, %v198, 0.0
        %202 = vadd.xlane.f32.xlu0 %v201
        %v203 = vpop.xlane.xlu0 %202
        %v204 = vrcp.pop 16.0
        %v205 = vmul.f32 %v203, %v204
        %v206 = vsub.f32 %v198, %v205
        %v207 = vmul.f32 %v206, %v206
        %v208 = vsel %vm200, %v207, 0.0
        %209 = vadd.xlane.f32.xlu0 %v208
        %v210 = vpop.xlane.xlu0 %209
        %v211 = vmul.f32 %v210, %v204
        %v212 = vadd.f32 %v211, 1e-05
        %v213 = vrsqrt.pop %v212
        %v214 = vmul.f32 %v206, %v213
        %v215 = vld [vmem:[%s2 + $0x2c0] ss:$0 sm:$0xff]
        %v216 = vmul.f32 %v214, %v215
        %v217 = vld [vmem:[%s2 + $0x2c1] ss:$0 sm:$0xff]
        %v218 = vadd.f32 %v216, %v217
        %v219 = vld [vmem:[%s2 + $0x2c2] ss:$0 sm:$0xff]
        %v220 = vmul.f32 %v214, %v219
        %v221 = vld [vmem:[%s2 + $0x2c3] ss:$0 sm:$0xff]
        %v222 = vadd.f32 %v220, %v221
        %224 = vrot.lane.b32.xlu0 %v222, 16
        %v225 = vpop.permute.xlu0 %224
        %v227 = vsel %vm200, %v218, %v225
        %v228 = vld [vmem:[%s2] sm:$0xff]
        %v229 = vld [vmem:[%s2 + $0x10] sm:$0xff]
        %v230 = vld [vmem:[%s2 + $0x20] sm:$0xff]
        %v231 = vld [vmem:[%s2 + $0x30] sm:$0xff]
        %v232 = vld [vmem:[%s2 + $0x2c4] ss:$0 sm:$0xff]
        %vm233 = vcmask 261120
        %v235 = vsel %vm233, %v227, 0
        %237 = vmatprep.subr.mxu0 0.0
        %238 = vmatpush1.msra.mxu0 %v228
        %239 = vmatprep.subr.mxu0 0.0
        %240 = vmatpush1.msra.mxu0 %v229
        %241 = vmatprep.subr.mxu0 0.0
        %242 = vmatpush1.msra.mxu0 %v230
        %243 = vmatprep.subr.mxu0 0.0
        %244 = vmatpush1.msra.mxu0 %v231
        %245 = vmatprep.subr.mxu0 0.0
        %246 = vmatpush1.msra.mxu0 0.0
        %247 = vmatprep.subr.mxu0 0.0
        %248 = vmatpush1.msra.mxu0 0.0
        %249 = vmatprep.subr.mxu0 0.0
        %250 = vmatpush1.msra.mxu0 0.0
        %251 = vmatprep.subr.mxu0 0.0
        %252 = vmatpush1.msra.mxu0 0.0
        %253 = vmatprep.subr.mxu0 0.0
        %254 = vmatpush1.msra.mxu0 0.0
        %255 = vmatprep.subr.mxu0 0.0
        %256 = vmatpush1.msra.mxu0 0.0
        %257 = vmatprep.subr.mxu0 0.0
        %258 = vmatpush1.msra.mxu0 0.0
        %259 = vmatprep.subr.mxu0 0.0
        %260 = vmatpush1.msra.mxu0 0.0
        %261 = vmatprep.subr.mxu0 0.0
        %262 = vmatpush1.msra.mxu0 0.0
        %263 = vmatprep.subr.mxu0 0.0
        %264 = vmatpush1.msra.mxu0 0.0
        %265 = vmatprep.subr.mxu0 0.0
        %266 = vmatpush1.msra.mxu0 0.0
        %267 = vmatprep.subr.mxu0 0.0
        %268 = vmatpush1.msra.mxu0 0.0
        %269 = vmatprep.subr.mxu0 0.0
        %270 = vmatpush1.msra.mxu0 0.0
        %271 = vmatprep.subr.mxu0 0.0
        %272 = vmatpush1.msra.mxu0 0.0
        %273 = vmatprep.subr.mxu0 0.0
        %274 = vmatpush1.msra.mxu0 0.0
        %275 = vmatprep.subr.mxu0 0.0
        %276 = vmatpush1.msra.mxu0 0.0
        %277 = vmatprep.subr.mxu0 0.0
        %278 = vmatpush1.msra.mxu0 0.0
        %279 = vmatprep.subr.mxu0 0.0
        %280 = vmatpush1.msra.mxu0 0.0
        %281 = vmatprep.subr.mxu0 0.0
        %282 = vmatpush1.msra.mxu0 0.0
        %283 = vmatprep.subr.mxu0 0.0
        %284 = vmatpush1.msra.mxu0 0.0
        %285 = vmatprep.subr.mxu0 0.0
        %286 = vmatpush1.msra.mxu0 0.0
        %287 = vmatprep.subr.mxu0 0.0
        %288 = vmatpush1.msra.mxu0 0.0
        %289 = vmatprep.subr.mxu0 0.0
        %290 = vmatpush1.msra.mxu0 0.0
        %291 = vmatprep.subr.mxu0 0.0
        %292 = vmatpush1.msra.mxu0 0.0
        %293 = vmatprep.subr.mxu0 0.0
        %294 = vmatpush1.msra.mxu0 0.0
        %295 = vmatprep.subr.mxu0 0.0
        %296 = vmatpush1.msra.mxu0 0.0
        %297 = vmatprep.subr.mxu0 0.0
        %298 = vmatpush1.msra.mxu0 0.0
        %299 = vmatprep.subr.mxu0 0.0
        %300 = vmatpush1.msra.mxu0 0.0
        %301 = vmatprep.mubr.f32.mxu0 0.0
        %302 = vmatmul.mubr.f32.gmra.mrb[0].mxu0 %v235
        %v303 = vpop.f32.mrb[0].mxu0
        %v304 = vadd.f32 %v232, %v303
        %v305 = vpop.f32.mrb[0].mxu0
        %306 = vdwg.mxu0
        %v307 = vxor.u32 %v304, 2147483648
        %v308 = vmul.f32 %v307, 1.442695
        %v309 = vpow.pop %v308
        %v310 = vadd.f32 %v309, 1.0
        %v311 = vrcp.pop %v310
        %v312 = vmul.f32 1.0, %v311
        %v313 = vmul.f32 %v304, %v312
        %315 = vrot.lane.b32.xlu0 %v313, 16
        %v316 = vpop.permute.xlu0 %315
        %319 = vrot.lane.b32.xlu0 %v199, 32
        %v320 = vpop.permute.xlu0 %319
        %v322 = vsel %vm200, %v198, %v316
        %v323 = vsel %vm233, %v322, %v320
        %v324 = vld [vmem:[%s2 + $0x40] sm:$0xff]
        %v325 = vld [vmem:[%s2 + $0x50] sm:$0xff]
        %v326 = vld [vmem:[%s2 + $0x60] sm:$0xff]
        %v327 = vld [vmem:[%s2 + $0x70] sm:$0xff]
        %v328 = vld [vmem:[%s2 + $0x80] sm:$0xff]
        %v329 = vld [vmem:[%s2 + $0x90] sm:$0xff]
        %v330 = vld [vmem:[%s2 + $0xa0] sm:$0xff]
        %v331 = vld [vmem:[%s2 + $0xb0] sm:$0xff]
        %v332 = vld [vmem:[%s2 + $0x2c5] ss:$0 sm:$0xff]
        %vm333 = vcmask 523264
        %v335 = vsel %vm333, %v323, 0
        %337 = vmatprep.subr.mxu0 0.0
        %338 = vmatpush1.msra.mxu0 %v324
        %339 = vmatprep.subr.mxu0 0.0
        %340 = vmatpush1.msra.mxu0 %v325
        %341 = vmatprep.subr.mxu0 0.0
        %342 = vmatpush1.msra.mxu0 %v326
        %343 = vmatprep.subr.mxu0 0.0
        %344 = vmatpush1.msra.mxu0 %v327
        %345 = vmatprep.subr.mxu0 0.0
        %346 = vmatpush1.msra.mxu0 %v328
        %347 = vmatprep.subr.mxu0 0.0
        %348 = vmatpush1.msra.mxu0 %v329
        %349 = vmatprep.subr.mxu0 0.0
        %350 = vmatpush1.msra.mxu0 %v330
        %351 = vmatprep.subr.mxu0 0.0
        %352 = vmatpush1.msra.mxu0 %v331
        %353 = vmatprep.subr.mxu0 0.0
        %354 = vmatpush1.msra.mxu0 0.0
        %355 = vmatprep.subr.mxu0 0.0
        %356 = vmatpush1.msra.mxu0 0.0
        %357 = vmatprep.subr.mxu0 0.0
        %358 = vmatpush1.msra.mxu0 0.0
        %359 = vmatprep.subr.mxu0 0.0
        %360 = vmatpush1.msra.mxu0 0.0
        %361 = vmatprep.subr.mxu0 0.0
        %362 = vmatpush1.msra.mxu0 0.0
        %363 = vmatprep.subr.mxu0 0.0
        %364 = vmatpush1.msra.mxu0 0.0
        %365 = vmatprep.subr.mxu0 0.0
        %366 = vmatpush1.msra.mxu0 0.0
        %367 = vmatprep.subr.mxu0 0.0
        %368 = vmatpush1.msra.mxu0 0.0
        %369 = vmatprep.subr.mxu0 0.0
        %370 = vmatpush1.msra.mxu0 0.0
        %371 = vmatprep.subr.mxu0 0.0
        %372 = vmatpush1.msra.mxu0 0.0
        %373 = vmatprep.subr.mxu0 0.0
        %374 = vmatpush1.msra.mxu0 0.0
        %375 = vmatprep.subr.mxu0 0.0
        %376 = vmatpush1.msra.mxu0 0.0
        %377 = vmatprep.subr.mxu0 0.0
        %378 = vmatpush1.msra.mxu0 0.0
        %379 = vmatprep.subr.mxu0 0.0
        %380 = vmatpush1.msra.mxu0 0.0
        %381 = vmatprep.subr.mxu0 0.0
        %382 = vmatpush1.msra.mxu0 0.0
        %383 = vmatprep.subr.mxu0 0.0
        %384 = vmatpush1.msra.mxu0 0.0
        %385 = vmatprep.subr.mxu0 0.0
        %386 = vmatpush1.msra.mxu0 0.0
        %387 = vmatprep.subr.mxu0 0.0
        %388 = vmatpush1.msra.mxu0 0.0
        %389 = vmatprep.subr.mxu0 0.0
        %390 = vmatpush1.msra.mxu0 0.0
        %391 = vmatprep.subr.mxu0 0.0
        %392 = vmatpush1.msra.mxu0 0.0
        %393 = vmatprep.subr.mxu0 0.0
        %394 = vmatpush1.msra.mxu0 0.0
        %395 = vmatprep.subr.mxu0 0.0
        %396 = vmatpush1.msra.mxu0 0.0
        %397 = vmatprep.subr.mxu0 0.0
        %398 = vmatpush1.msra.mxu0 0.0
        %399 = vmatprep.subr.mxu0 0.0
        %400 = vmatpush1.msra.mxu0 0.0
        %401 = vmatprep.mubr.f32.mxu0 0.0
        %402 = vmatmul.mubr.f32.gmra.mrb[0].mxu0 %v335
        %v403 = vpop.f32.mrb[0].mxu0
        %v404 = vadd.f32 %v332, %v403
        %v405 = vpop.f32.mrb[0].mxu0
        %406 = vdwg.mxu0
        %v407 = vtanh.pop %v404
        %v408 = vxor.u32 %v404, 2147483648
        %v409 = vmul.f32 %v408, 1.442695
        %v410 = vpow.pop %v409
        %v411 = vadd.f32 %v410, 1.0
        %v412 = vrcp.pop %v411
        %v413 = vmul.f32 1.0, %v412
        %414 = vrot.lane.b32.xlu0 %v199, 96
        %v415 = vpop.permute.xlu0 %414
        %v417 = vadd.f32 %v404, %v415
        %419 = vrot.lane.b32.xlu0 %v404, 32
        %v420 = vpop.permute.xlu0 %419
        %v422 = vmax.f32 %v417, %v420
        %424 = vrot.lane.b32.xlu0 %v422, 96
        %v425 = vpop.permute.xlu0 %424
        %v427 = vsub.f32 %v404, %v425
        %v428 = vmul.f32 %v427, 1.442695
        %v429 = vpow.pop %v428
        %v430 = vsub.f32 %v417, %v422
        %v431 = vmul.f32 %v430, 1.442695
        %v432 = vpow.pop %v431
        %v433 = vmul.f32 %v432, %v320
        %435 = vrot.lane.b32.xlu0 %v407, 32
        %v436 = vpop.permute.xlu0 %435
        %v438 = vmul.f32 %v429, %v436
        %440 = vrot.lane.b32.xlu0 %v438, 32
        %v441 = vpop.permute.xlu0 %440
        %v443 = vadd.f32 %v433, %v441
        %v444 = vmul.f32 %v432, %v199
        %446 = vrot.lane.b32.xlu0 %v429, 32
        %v447 = vpop.permute.xlu0 %446
        %v449 = vadd.f32 %v444, %v447
        %451 = vrot.lane.b32.xlu0 %v443, 32
        %v452 = vpop.permute.xlu0 %451
        %v454 = vmul.f32 %v413, %v452
        %v455 = vadd.f32 %v449, 1e-06
        %457 = vrot.lane.b32.xlu0 %v455, 32
        %v458 = vpop.permute.xlu0 %457
        %v460 = vrcp.pop %v458
        %v461 = vmul.f32 %v454, %v460
        %v462 = vld [vmem:[%s2 + $0x100] sm:$0xff]
        %v463 = vld [vmem:[%s2 + $0x110] sm:$0xff]
        %v464 = vld [vmem:[%s2 + $0x120] sm:$0xff]
        %v465 = vld [vmem:[%s2 + $0x130] sm:$0xff]
        %v466 = vld [vmem:[%s2 + $0x2c6] ss:$0 sm:$0xff]
        %468 = vrot.lane.b32.xlu0 %v304, 112
        %v469 = vpop.permute.xlu0 %468
        %v470 = vsel %vm233, %v469, 0
        %472 = vmatprep.subr.mxu0 0.0
        %473 = vmatpush1.msra.mxu0 %v462
        %474 = vmatprep.subr.mxu0 0.0
        %475 = vmatpush1.msra.mxu0 %v463
        %476 = vmatprep.subr.mxu0 0.0
        %477 = vmatpush1.msra.mxu0 %v464
        %478 = vmatprep.subr.mxu0 0.0
        %479 = vmatpush1.msra.mxu0 %v465
        %480 = vmatprep.subr.mxu0 0.0
        %481 = vmatpush1.msra.mxu0 0.0
        %482 = vmatprep.subr.mxu0 0.0
        %483 = vmatpush1.msra.mxu0 0.0
        %484 = vmatprep.subr.mxu0 0.0
        %485 = vmatpush1.msra.mxu0 0.0
        %486 = vmatprep.subr.mxu0 0.0
        %487 = vmatpush1.msra.mxu0 0.0
        %488 = vmatprep.subr.mxu0 0.0
        %489 = vmatpush1.msra.mxu0 0.0
        %490 = vmatprep.subr.mxu0 0.0
        %491 = vmatpush1.msra.mxu0 0.0
        %492 = vmatprep.subr.mxu0 0.0
        %493 = vmatpush1.msra.mxu0 0.0
        %494 = vmatprep.subr.mxu0 0.0
        %495 = vmatpush1.msra.mxu0 0.0
        %496 = vmatprep.subr.mxu0 0.0
        %497 = vmatpush1.msra.mxu0 0.0
        %498 = vmatprep.subr.mxu0 0.0
        %499 = vmatpush1.msra.mxu0 0.0
        %500 = vmatprep.subr.mxu0 0.0
        %501 = vmatpush1.msra.mxu0 0.0
        %502 = vmatprep.subr.mxu0 0.0
        %503 = vmatpush1.msra.mxu0 0.0
        %504 = vmatprep.subr.mxu0 0.0
        %505 = vmatpush1.msra.mxu0 0.0
        %506 = vmatprep.subr.mxu0 0.0
        %507 = vmatpush1.msra.mxu0 0.0
        %508 = vmatprep.subr.mxu0 0.0
        %509 = vmatpush1.msra.mxu0 0.0
        %510 = vmatprep.subr.mxu0 0.0
        %511 = vmatpush1.msra.mxu0 0.0
        %512 = vmatprep.subr.mxu0 0.0
        %513 = vmatpush1.msra.mxu0 0.0
        %514 = vmatprep.subr.mxu0 0.0
        %515 = vmatpush1.msra.mxu0 0.0
        %516 = vmatprep.subr.mxu0 0.0
        %517 = vmatpush1.msra.mxu0 0.0
        %518 = vmatprep.subr.mxu0 0.0
        %519 = vmatpush1.msra.mxu0 0.0
        %520 = vmatprep.subr.mxu0 0.0
        %521 = vmatpush1.msra.mxu0 0.0
        %522 = vmatprep.subr.mxu0 0.0
        %523 = vmatpush1.msra.mxu0 0.0
        %524 = vmatprep.subr.mxu0 0.0
        %525 = vmatpush1.msra.mxu0 0.0
        %526 = vmatprep.subr.mxu0 0.0
        %527 = vmatpush1.msra.mxu0 0.0
        %528 = vmatprep.subr.mxu0 0.0
        %529 = vmatpush1.msra.mxu0 0.0
        %530 = vmatprep.subr.mxu0 0.0
        %531 = vmatpush1.msra.mxu0 0.0
        %532 = vmatprep.subr.mxu0 0.0
        %533 = vmatpush1.msra.mxu0 0.0
        %534 = vmatprep.subr.mxu0 0.0
        %535 = vmatpush1.msra.mxu0 0.0
        %536 = vmatprep.mubr.f32.mxu0 0.0
        %537 = vmatmul.mubr.f32.gmra.mrb[0].mxu0 %v470
        %v538 = vpop.f32.mrb[0].mxu0
        %v539 = vadd.f32 %v466, %v538
        %v540 = vpop.f32.mrb[0].mxu0
        %541 = vdwg.mxu0
        %v542 = vxor.u32 %v539, 2147483648
        %v543 = vmul.f32 %v542, 1.442695
        %v544 = vpow.pop %v543
        %v545 = vadd.f32 %v544, 1.0
        %v546 = vrcp.pop %v545
        %v547 = vmul.f32 1.0, %v546
        %v548 = vmul.f32 %v539, %v547
        %549 = vrot.lane.b32.xlu0 %v304, 16
        %v550 = vpop.permute.xlu0 %549
        %v552 = vsel %vm233, %v548, %v550
        %v553 = vld [vmem:[%s2 + $0x140] sm:$0xff]
        %v554 = vld [vmem:[%s2 + $0x148] sm:$0xff]
        %v555 = vld [vmem:[%s2 + $0x150] sm:$0xff]
        %v556 = vld [vmem:[%s2 + $0x158] sm:$0xff]
        %v557 = vld [vmem:[%s2 + $0x160] sm:$0xff]
        %v558 = vld [vmem:[%s2 + $0x168] sm:$0xff]
        %v559 = vld [vmem:[%s2 + $0x170] sm:$0xff]
        %v560 = vld [vmem:[%s2 + $0x178] sm:$0xff]
        %v561 = vld [vmem:[%s2 + $0x180] sm:$0xff]
        %v562 = vld [vmem:[%s2 + $0x188] sm:$0xff]
        %v563 = vld [vmem:[%s2 + $0x190] sm:$0xff]
        %v564 = vld [vmem:[%s2 + $0x198] sm:$0xff]
        %v565 = vld [vmem:[%s2 + $0x1a0] sm:$0xff]
        %v566 = vld [vmem:[%s2 + $0x1a8] sm:$0xff]
        %v567 = vld [vmem:[%s2 + $0x1b0] sm:$0xff]
        %v568 = vld [vmem:[%s2 + $0x1b8] sm:$0xff]
        %s569 = scalar_lea.vmem %s2, 711
        %v570 = vld [vmem:[%s569] ss:$8 sm:$0x3]
        %v572 = vlaneseq
        %v573 = vshrl.u32 %v572, 7
        %v574 = vsub.s32 0, %v573
        %v575 = vrot.slane %v570, %v574
        %v576 = vlaneseq
        %v577 = vshrl.u32 %v576, 7
        %v578 = vsub.s32 1, %v577
        %v579 = vrot.slane %v570, %v578
        %v583 = vsel %vm333, %v552, 0
        %585 = vmatprep.subr.mxu0 %v554
        %586 = vmatpush1.msra.mxu0 %v553
        %587 = vmatprep.subr.mxu0 %v556
        %588 = vmatpush1.msra.mxu0 %v555
        %589 = vmatprep.subr.mxu0 %v558
        %590 = vmatpush1.msra.mxu0 %v557
        %591 = vmatprep.subr.mxu0 %v560
        %592 = vmatpush1.msra.mxu0 %v559
        %593 = vmatprep.subr.mxu0 %v562
        %594 = vmatpush1.msra.mxu0 %v561
        %595 = vmatprep.subr.mxu0 %v564
        %596 = vmatpush1.msra.mxu0 %v563
        %597 = vmatprep.subr.mxu0 %v566
        %598 = vmatpush1.msra.mxu0 %v565
        %599 = vmatprep.subr.mxu0 %v568
        %600 = vmatpush1.msra.mxu0 %v567
        %601 = vmatprep.subr.mxu0 0.0
        %602 = vmatpush1.msra.mxu0 0.0
        %603 = vmatprep.subr.mxu0 0.0
        %604 = vmatpush1.msra.mxu0 0.0
        %605 = vmatprep.subr.mxu0 0.0
        %606 = vmatpush1.msra.mxu0 0.0
        %607 = vmatprep.subr.mxu0 0.0
        %608 = vmatpush1.msra.mxu0 0.0
        %609 = vmatprep.subr.mxu0 0.0
        %610 = vmatpush1.msra.mxu0 0.0
        %611 = vmatprep.subr.mxu0 0.0
        %612 = vmatpush1.msra.mxu0 0.0
        %613 = vmatprep.subr.mxu0 0.0
        %614 = vmatpush1.msra.mxu0 0.0
        %615 = vmatprep.subr.mxu0 0.0
        %616 = vmatpush1.msra.mxu0 0.0
        %617 = vmatprep.subr.mxu0 0.0
        %618 = vmatpush1.msra.mxu0 0.0
        %619 = vmatprep.subr.mxu0 0.0
        %620 = vmatpush1.msra.mxu0 0.0
        %621 = vmatprep.subr.mxu0 0.0
        %622 = vmatpush1.msra.mxu0 0.0
        %623 = vmatprep.subr.mxu0 0.0
        %624 = vmatpush1.msra.mxu0 0.0
        %625 = vmatprep.subr.mxu0 0.0
        %626 = vmatpush1.msra.mxu0 0.0
        %627 = vmatprep.subr.mxu0 0.0
        %628 = vmatpush1.msra.mxu0 0.0
        %629 = vmatprep.subr.mxu0 0.0
        %630 = vmatpush1.msra.mxu0 0.0
        %631 = vmatprep.subr.mxu0 0.0
        %632 = vmatpush1.msra.mxu0 0.0
        %633 = vmatprep.subr.mxu0 0.0
        %634 = vmatpush1.msra.mxu0 0.0
        %635 = vmatprep.subr.mxu0 0.0
        %636 = vmatpush1.msra.mxu0 0.0
        %637 = vmatprep.subr.mxu0 0.0
        %638 = vmatpush1.msra.mxu0 0.0
        %639 = vmatprep.subr.mxu0 0.0
        %640 = vmatpush1.msra.mxu0 0.0
        %641 = vmatprep.subr.mxu0 0.0
        %642 = vmatpush1.msra.mxu0 0.0
        %643 = vmatprep.subr.mxu0 0.0
        %644 = vmatpush1.msra.mxu0 0.0
        %645 = vmatprep.subr.mxu0 0.0
        %646 = vmatpush1.msra.mxu0 0.0
        %647 = vmatprep.subr.mxu0 0.0
        %648 = vmatpush1.msra.mxu0 0.0
        %649 = vmatprep.mubr.f32.mxu0 0.0
        %650 = vmatmul.mubr.f32.gmra.mrb[0].mxu0 %v583
        %v651 = vpop.f32.mrb[0].mxu0
        %v652 = vadd.f32 %v575, %v651
        %v653 = vpop.f32.mrb[0].mxu0
        %v654 = vadd.f32 %v579, %v653
        %655 = vdwg.mxu0
        %v656 = vxor.u32 %v654, 2147483648
        %v657 = vmul.f32 %v656, 1.442695
        %v658 = vpow.pop %v657
        %v659 = vadd.f32 %v658, 1.0
        %v660 = vrcp.pop %v659
        %v661 = vmul.f32 1.0, %v660
        %v662 = vadd.f32 %v654, %v320
        %664 = vrot.lane.b32.xlu0 %v652, 32
        %v665 = vpop.permute.xlu0 %664
        %v667 = vmax.f32 %v662, %v665
        %669 = vrot.lane.b32.xlu0 %v667, 96
        %v670 = vpop.permute.xlu0 %669
        %v672 = vsub.f32 %v652, %v670
        %v673 = vmul.f32 %v672, 1.442695
        %v674 = vpow.pop %v673
        %v675 = vsub.f32 %v662, %v667
        %v676 = vmul.f32 %v675, 1.442695
        %v677 = vpow.pop %v676
        %v678 = vmul.f32 %v677, %v415
        %679 = vrot.lane.b32.xlu0 %v652, 96
        %v680 = vpop.permute.xlu0 %679
        %v682 = vmul.f32 %v654, %v680
        %684 = vrot.lane.b32.xlu0 %v682, 64
        %v685 = vpop.permute.xlu0 %684
        %v687 = vmul.f32 %v674, %v685
        %689 = vrot.lane.b32.xlu0 %v687, 32
        %v690 = vpop.permute.xlu0 %689
        %v692 = vadd.f32 %v678, %v690
        %693 = vrot.lane.b32.xlu0 %v199, 64
        %v694 = vpop.permute.xlu0 %693
        %v696 = vmul.f32 %v677, %v694
        %v697 = vmul.f32 %v674, %v665
        %699 = vrot.lane.b32.xlu0 %v697, 32
        %v700 = vpop.permute.xlu0 %699
        %v702 = vadd.f32 %v696, %v700
        %v703 = vmul.f32 %v702, %v680
        %v704 = vmul.f32 %v703, %v703
        %v705 = vsel %vm233, %v704, 0.0
        %706 = vadd.xlane.f32.xlu0 %v705
        %v707 = vpop.xlane.xlu0 %706
        %v708 = vrsqrt.pop %v707
        %v709 = vmul.f32 %v707, %v708
        %vm710 = vcmp.eq.f32.partialorder %v707, inf
        %v711 = vsel %vm710, %v707, %v709
        %vm712 = vcmp.eq.f32.partialorder %v707, 0.0
        %v713 = vand.u32 %v707, 2147483648
        %v714 = vsel %vm712, %v713, %v711
        %v715 = vadd.f32 %v714, 1e-06
        %v716 = vmul.f32 %v692, %v680
        %718 = vrot.lane.b32.xlu0 %v716, 64
        %v719 = vpop.permute.xlu0 %718
        %v721 = vmul.f32 %v661, %v719
        %v722 = vrcp.pop %v715
        %v723 = vmul.f32 %v721, %v722
        %v724 = vmul.f32 %v461, %v461
        %v725 = vmul.f32 %v723, %v723
        %727 = vrot.lane.b32.xlu0 %v723, 32
        %v728 = vpop.permute.xlu0 %727
        %730 = vrot.lane.b32.xlu0 %v725, 32
        %v731 = vpop.permute.xlu0 %730
        %v732 = vld [vmem:[%s2 + $0x280] sm:$0xff]
        %v733 = vld [vmem:[%s2 + $0x290] sm:$0xff]
        %v734 = vld [vmem:[%s2 + $0x2a0] sm:$0xff]
        %v735 = vld [vmem:[%s2 + $0x2b0] sm:$0xff]
        %738 = vrot.lane.b32.xlu0 %v461, 32
        %v739 = vpop.permute.xlu0 %738
        %740 = vrot.lane.b32.xlu0 %v724, 32
        %v741 = vpop.permute.xlu0 %740
        %742 = vrot.lane.b32.xlu0 %v728, 32
        %v743 = vpop.permute.xlu0 %742
        %744 = vrot.lane.b32.xlu0 %v731, 32
        %v745 = vpop.permute.xlu0 %744
        %v746 = vsel %vm233, %v739, 0
        %v748 = vsel %vm233, %v741, 0
        %v750 = vsel %vm233, %v743, 0
        %v752 = vsel %vm233, %v745, 0
        %754 = vmatprep.subr.mxu0 0.0
        %755 = vmatpush1.msra.mxu0 %v732
        %756 = vmatprep.subr.mxu0 0.0
        %757 = vmatpush1.msra.mxu0 %v733
        %758 = vmatprep.subr.mxu0 0.0
        %759 = vmatpush1.msra.mxu0 %v734
        %760 = vmatprep.subr.mxu0 0.0
        %761 = vmatpush1.msra.mxu0 %v735
        %762 = vmatprep.subr.mxu0 0.0
        %763 = vmatpush1.msra.mxu0 0.0
        %764 = vmatprep.subr.mxu0 0.0
        %765 = vmatpush1.msra.mxu0 0.0
        %766 = vmatprep.subr.mxu0 0.0
        %767 = vmatpush1.msra.mxu0 0.0
        %768 = vmatprep.subr.mxu0 0.0
        %769 = vmatpush1.msra.mxu0 0.0
        %770 = vmatprep.subr.mxu0 0.0
        %771 = vmatpush1.msra.mxu0 0.0
        %772 = vmatprep.subr.mxu0 0.0
        %773 = vmatpush1.msra.mxu0 0.0
        %774 = vmatprep.subr.mxu0 0.0
        %775 = vmatpush1.msra.mxu0 0.0
        %776 = vmatprep.subr.mxu0 0.0
        %777 = vmatpush1.msra.mxu0 0.0
        %778 = vmatprep.subr.mxu0 0.0
        %779 = vmatpush1.msra.mxu0 0.0
        %780 = vmatprep.subr.mxu0 0.0
        %781 = vmatpush1.msra.mxu0 0.0
        %782 = vmatprep.subr.mxu0 0.0
        %783 = vmatpush1.msra.mxu0 0.0
        %784 = vmatprep.subr.mxu0 0.0
        %785 = vmatpush1.msra.mxu0 0.0
        %786 = vmatprep.subr.mxu0 0.0
        %787 = vmatpush1.msra.mxu0 0.0
        %788 = vmatprep.subr.mxu0 0.0
        %789 = vmatpush1.msra.mxu0 0.0
        %790 = vmatprep.subr.mxu0 0.0
        %791 = vmatpush1.msra.mxu0 0.0
        %792 = vmatprep.subr.mxu0 0.0
        %793 = vmatpush1.msra.mxu0 0.0
        %794 = vmatprep.subr.mxu0 0.0
        %795 = vmatpush1.msra.mxu0 0.0
        %796 = vmatprep.subr.mxu0 0.0
        %797 = vmatpush1.msra.mxu0 0.0
        %798 = vmatprep.subr.mxu0 0.0
        %799 = vmatpush1.msra.mxu0 0.0
        %800 = vmatprep.subr.mxu0 0.0
        %801 = vmatpush1.msra.mxu0 0.0
        %802 = vmatprep.subr.mxu0 0.0
        %803 = vmatpush1.msra.mxu0 0.0
        %804 = vmatprep.subr.mxu0 0.0
        %805 = vmatpush1.msra.mxu0 0.0
        %806 = vmatprep.subr.mxu0 0.0
        %807 = vmatpush1.msra.mxu0 0.0
        %808 = vmatprep.subr.mxu0 0.0
        %809 = vmatpush1.msra.mxu0 0.0
        %810 = vmatprep.subr.mxu0 0.0
        %811 = vmatpush1.msra.mxu0 0.0
        %812 = vmatprep.subr.mxu0 0.0
        %813 = vmatpush1.msra.mxu0 0.0
        %814 = vmatprep.subr.mxu0 0.0
        %815 = vmatpush1.msra.mxu0 0.0
        %816 = vmatprep.subr.mxu0 0.0
        %817 = vmatpush1.msra.mxu0 0.0
        %818 = vmatprep.mubr.f32.mxu0 0.0
        %819 = vmatmul.mubr.f32.gmra.mrb[0].mxu0 %v746
        %v820 = vpop.f32.mrb[0].mxu0
        %v821 = vadd.f32 0.0, %v820
        %v822 = vpop.f32.mrb[0].mxu0
        %823 = vmatprep.mubr.f32.mxu0 0.0
        %824 = vmatmul.mubr.f32.gmra.mrb[0].mxu0 %v748
        %v825 = vpop.f32.mrb[0].mxu0
        %v826 = vadd.f32 0.0, %v825
        %v827 = vpop.f32.mrb[0].mxu0
        %828 = vmatprep.mubr.f32.mxu0 0.0
        %829 = vmatmul.mubr.f32.gmra.mrb[0].mxu0 %v750
        %v830 = vpop.f32.mrb[0].mxu0
        %v831 = vadd.f32 0.0, %v830
        %v832 = vpop.f32.mrb[0].mxu0
        %833 = vmatprep.mubr.f32.mxu0 0.0
        %834 = vmatmul.mubr.f32.gmra.mrb[0].mxu0 %v752
        %v835 = vpop.f32.mrb[0].mxu0
        %v836 = vadd.f32 0.0, %v835
        %v837 = vpop.f32.mrb[0].mxu0
        %838 = vdwg.mxu0
        %v839 = vmul.f32 %v821, %v821
        %v840 = vsub.f32 %v826, %v839
        %v841 = vmax.f32 %v840, 0.0
        %v842 = vmul.f32 %v831, %v831
        %v843 = vsub.f32 %v836, %v842
        %v844 = vmax.f32 %v843, 0.0
        %846 = vrot.lane.b32.xlu0 %v821, 96
        %v847 = vpop.permute.xlu0 %846
        %v849 = vsub.f32 %v461, %v847
        %v850 = vadd.f32 %v841, 1e-05
        %v851 = vrsqrt.pop %v850
        %853 = vrot.lane.b32.xlu0 %v851, 96
        %v854 = vpop.permute.xlu0 %853
        %v856 = vmul.f32 %v849, %v854
        %v857 = vld [vmem:[%s2 + $0x2d0] ss:$0 sm:$0xff]
        %859 = vrot.lane.b32.xlu0 %v857, 96
        %v860 = vpop.permute.xlu0 %859
        %v862 = vmul.f32 %v856, %v860
        %v863 = vld [vmem:[%s2 + $0x2d1] ss:$0 sm:$0xff]
        %865 = vrot.lane.b32.xlu0 %v863, 96
        %v866 = vpop.permute.xlu0 %865
        %v868 = vadd.f32 %v862, %v866
        %870 = vrot.lane.b32.xlu0 %v831, 64
        %v871 = vpop.permute.xlu0 %870
        %v873 = vsub.f32 %v723, %v871
        %v874 = vadd.f32 %v844, 1e-05
        %v875 = vrsqrt.pop %v874
        %877 = vrot.lane.b32.xlu0 %v875, 64
        %v878 = vpop.permute.xlu0 %877
        %v880 = vmul.f32 %v873, %v878
        %v881 = vld [vmem:[%s2 + $0x2d2] ss:$0 sm:$0xff]
        %883 = vrot.lane.b32.xlu0 %v881, 64
        %v884 = vpop.permute.xlu0 %883
        %v886 = vmul.f32 %v880, %v884
        %v887 = vld [vmem:[%s2 + $0x2d3] ss:$0 sm:$0xff]
        %889 = vrot.lane.b32.xlu0 %v887, 64
        %v890 = vpop.permute.xlu0 %889
        %v892 = vadd.f32 %v886, %v890
        %v893 = vld [vmem:[%s2 + $0xc0] sm:$0xff]
        %v894 = vld [vmem:[%s2 + $0xd0] sm:$0xff]
        %v895 = vld [vmem:[%s2 + $0xe0] sm:$0xff]
        %v896 = vld [vmem:[%s2 + $0xf0] sm:$0xff]
        %v897 = vld [vmem:[%s2 + $0x2d4] ss:$0 sm:$0xff]
        %899 = vrot.lane.b32.xlu0 %v868, 32
        %v900 = vpop.permute.xlu0 %899
        %v901 = vsel %vm233, %v900, 0
        %903 = vmatprep.subr.mxu0 0.0
        %904 = vmatpush1.msra.mxu0 %v893
        %905 = vmatprep.subr.mxu0 0.0
        %906 = vmatpush1.msra.mxu0 %v894
        %907 = vmatprep.subr.mxu0 0.0
        %908 = vmatpush1.msra.mxu0 %v895
        %909 = vmatprep.subr.mxu0 0.0
        %910 = vmatpush1.msra.mxu0 %v896
        %911 = vmatprep.subr.mxu0 0.0
        %912 = vmatpush1.msra.mxu0 0.0
        %913 = vmatprep.subr.mxu0 0.0
        %914 = vmatpush1.msra.mxu0 0.0
        %915 = vmatprep.subr.mxu0 0.0
        %916 = vmatpush1.msra.mxu0 0.0
        %917 = vmatprep.subr.mxu0 0.0
        %918 = vmatpush1.msra.mxu0 0.0
        %919 = vmatprep.subr.mxu0 0.0
        %920 = vmatpush1.msra.mxu0 0.0
        %921 = vmatprep.subr.mxu0 0.0
        %922 = vmatpush1.msra.mxu0 0.0
        %923 = vmatprep.subr.mxu0 0.0
        %924 = vmatpush1.msra.mxu0 0.0
        %925 = vmatprep.subr.mxu0 0.0
        %926 = vmatpush1.msra.mxu0 0.0
        %927 = vmatprep.subr.mxu0 0.0
        %928 = vmatpush1.msra.mxu0 0.0
        %929 = vmatprep.subr.mxu0 0.0
        %930 = vmatpush1.msra.mxu0 0.0
        %931 = vmatprep.subr.mxu0 0.0
        %932 = vmatpush1.msra.mxu0 0.0
        %933 = vmatprep.subr.mxu0 0.0
        %934 = vmatpush1.msra.mxu0 0.0
        %935 = vmatprep.subr.mxu0 0.0
        %936 = vmatpush1.msra.mxu0 0.0
        %937 = vmatprep.subr.mxu0 0.0
        %938 = vmatpush1.msra.mxu0 0.0
        %939 = vmatprep.subr.mxu0 0.0
        %940 = vmatpush1.msra.mxu0 0.0
        %941 = vmatprep.subr.mxu0 0.0
        %942 = vmatpush1.msra.mxu0 0.0
        %943 = vmatprep.subr.mxu0 0.0
        %944 = vmatpush1.msra.mxu0 0.0
        %945 = vmatprep.subr.mxu0 0.0
        %946 = vmatpush1.msra.mxu0 0.0
        %947 = vmatprep.subr.mxu0 0.0
        %948 = vmatpush1.msra.mxu0 0.0
        %949 = vmatprep.subr.mxu0 0.0
        %950 = vmatpush1.msra.mxu0 0.0
        %951 = vmatprep.subr.mxu0 0.0
        %952 = vmatpush1.msra.mxu0 0.0
        %953 = vmatprep.subr.mxu0 0.0
        %954 = vmatpush1.msra.mxu0 0.0
        %955 = vmatprep.subr.mxu0 0.0
        %956 = vmatpush1.msra.mxu0 0.0
        %957 = vmatprep.subr.mxu0 0.0
        %958 = vmatpush1.msra.mxu0 0.0
        %959 = vmatprep.subr.mxu0 0.0
        %960 = vmatpush1.msra.mxu0 0.0
        %961 = vmatprep.subr.mxu0 0.0
        %962 = vmatpush1.msra.mxu0 0.0
        %963 = vmatprep.subr.mxu0 0.0
        %964 = vmatpush1.msra.mxu0 0.0
        %965 = vmatprep.subr.mxu0 0.0
        %966 = vmatpush1.msra.mxu0 0.0
        %967 = vmatprep.mubr.f32.mxu0 0.0
        %968 = vmatmul.mubr.f32.gmra.mrb[0].mxu0 %v901
        %v969 = vpop.f32.mrb[0].mxu0
        %v970 = vadd.f32 %v897, %v969
        %v971 = vpop.f32.mrb[0].mxu0
        %972 = vdwg.mxu0
        %v973 = vmul.f32 %v970, 0.70710677
        %vm974 = vcmp.ge.f32.partialorder %v973, 0.0
        %v975 = vsel %vm974, 1.0, -1.0
        %v976 = vand.u32 2147483647, %v973
        %v977 = vmul.f32 %v976, 0.3275911
        %v978 = vadd.f32 %v977, 1.0
        %v979 = vrcp.pop %v978
        %v980 = vmul.f32 1.0, %v979
        %v981 = vmul.f32 %v980, 1.0614054
        %v982 = vadd.f32 %v981, -1.4531521
        %v983 = vmul.f32 %v982, %v980
        %v984 = vadd.f32 %v983, 1.4214138
        %v985 = vmul.f32 %v984, %v980
        %v986 = vadd.f32 %v985, -0.28449672
        %v987 = vmul.f32 %v986, %v980
        %v988 = vadd.f32 %v987, 0.2548296
        %v989 = vmul.f32 %v988, %v980
        %v990 = vsub.f32 0.0, %v976
        %v991 = vmul.f32 %v990, %v976
        %v992 = vmul.f32 %v991, 1.442695
        %v993 = vpow.pop %v992
        %v994 = vmul.f32 %v989, %v993
        %v995 = vsub.f32 1.0, %v994
        %v996 = vmul.f32 %v975, %v995
        %v997 = vmul.f32 %v970, 0.5
        %v998 = vadd.f32 %v996, 1.0
        %v999 = vmul.f32 %v997, %v998
        %1001 = vrot.lane.b32.xlu0 %v999, 64
        %v1002 = vpop.permute.xlu0 %1001
        %v1004 = vmul.f32 %v970, %v1002
        %1005 = vrot.lane.b32.xlu0 %v652, 64
        %v1006 = vpop.permute.xlu0 %1005
        %v1008 = vadd.f32 %v892, %v1006
        %v1009 = vmul.f32 %v1008, %v316
        %v1010 = vsel %vm333, %v1004, %v1009
        %v1011 = vld [vmem:[%s2 + $0x1c0] sm:$0xff]
        %v1012 = vld [vmem:[%s2 + $0x1d0] sm:$0xff]
        %v1013 = vld [vmem:[%s2 + $0x1e0] sm:$0xff]
        %v1014 = vld [vmem:[%s2 + $0x1f0] sm:$0xff]
        %v1015 = vld [vmem:[%s2 + $0x200] sm:$0xff]
        %v1016 = vld [vmem:[%s2 + $0x210] sm:$0xff]
        %v1017 = vld [vmem:[%s2 + $0x220] sm:$0xff]
        %v1018 = vld [vmem:[%s2 + $0x230] sm:$0xff]
        %v1019 = vld [vmem:[%s2 + $0x240] sm:$0xff]
        %v1020 = vld [vmem:[%s2 + $0x250] sm:$0xff]
        %v1021 = vld [vmem:[%s2 + $0x260] sm:$0xff]
        %v1022 = vld [vmem:[%s2 + $0x270] sm:$0xff]
        %v1023 = vld [vmem:[%s2 + $0x2d5] ss:$0 sm:$0xff]
        %vm1024 = vcmask 785408
        %v1026 = vsel %vm1024, %v1010, 0
        %1028 = vmatprep.subr.mxu0 0.0
        %1029 = vmatpush1.msra.mxu0 %v1011
        %1030 = vmatprep.subr.mxu0 0.0
        %1031 = vmatpush1.msra.mxu0 %v1012
        %1032 = vmatprep.subr.mxu0 0.0
        %1033 = vmatpush1.msra.mxu0 %v1013
        %1034 = vmatprep.subr.mxu0 0.0
        %1035 = vmatpush1.msra.mxu0 %v1014
        %1036 = vmatprep.subr.mxu0 0.0
        %1037 = vmatpush1.msra.mxu0 %v1015
        %1038 = vmatprep.subr.mxu0 0.0
        %1039 = vmatpush1.msra.mxu0 %v1016
        %1040 = vmatprep.subr.mxu0 0.0
        %1041 = vmatpush1.msra.mxu0 %v1017
        %1042 = vmatprep.subr.mxu0 0.0
        %1043 = vmatpush1.msra.mxu0 %v1018
        %1044 = vmatprep.subr.mxu0 0.0
        %1045 = vmatpush1.msra.mxu0 %v1019
        %1046 = vmatprep.subr.mxu0 0.0
        %1047 = vmatpush1.msra.mxu0 %v1020
        %1048 = vmatprep.subr.mxu0 0.0
        %1049 = vmatpush1.msra.mxu0 %v1021
        %1050 = vmatprep.subr.mxu0 0.0
        %1051 = vmatpush1.msra.mxu0 %v1022
        %1052 = vmatprep.subr.mxu0 0.0
        %1053 = vmatpush1.msra.mxu0 0.0
        %1054 = vmatprep.subr.mxu0 0.0
        %1055 = vmatpush1.msra.mxu0 0.0
        %1056 = vmatprep.subr.mxu0 0.0
        %1057 = vmatpush1.msra.mxu0 0.0
        %1058 = vmatprep.subr.mxu0 0.0
        %1059 = vmatpush1.msra.mxu0 0.0
        %1060 = vmatprep.subr.mxu0 0.0
        %1061 = vmatpush1.msra.mxu0 0.0
        %1062 = vmatprep.subr.mxu0 0.0
        %1063 = vmatpush1.msra.mxu0 0.0
        %1064 = vmatprep.subr.mxu0 0.0
        %1065 = vmatpush1.msra.mxu0 0.0
        %1066 = vmatprep.subr.mxu0 0.0
        %1067 = vmatpush1.msra.mxu0 0.0
        %1068 = vmatprep.subr.mxu0 0.0
        %1069 = vmatpush1.msra.mxu0 0.0
        %1070 = vmatprep.subr.mxu0 0.0
        %1071 = vmatpush1.msra.mxu0 0.0
        %1072 = vmatprep.subr.mxu0 0.0
        %1073 = vmatpush1.msra.mxu0 0.0
        %1074 = vmatprep.subr.mxu0 0.0
        %1075 = vmatpush1.msra.mxu0 0.0
        %1076 = vmatprep.subr.mxu0 0.0
        %1077 = vmatpush1.msra.mxu0 0.0
        %1078 = vmatprep.subr.mxu0 0.0
        %1079 = vmatpush1.msra.mxu0 0.0
        %1080 = vmatprep.subr.mxu0 0.0
        %1081 = vmatpush1.msra.mxu0 0.0
        %1082 = vmatprep.subr.mxu0 0.0
        %1083 = vmatpush1.msra.mxu0 0.0
        %1084 = vmatprep.subr.mxu0 0.0
        %1085 = vmatpush1.msra.mxu0 0.0
        %1086 = vmatprep.subr.mxu0 0.0
        %1087 = vmatpush1.msra.mxu0 0.0
        %1088 = vmatprep.subr.mxu0 0.0
        %1089 = vmatpush1.msra.mxu0 0.0
        %1090 = vmatprep.subr.mxu0 0.0
        %1091 = vmatpush1.msra.mxu0 0.0
        %1092 = vmatprep.mubr.f32.mxu0 0.0
        %1093 = vmatmul.mubr.f32.gmra.mrb[0].mxu0 %v1026
        %v1094 = vpop.f32.mrb[0].mxu0
        %v1095 = vadd.f32 %v1023, %v1094
        %v1096 = vpop.f32.mrb[0].mxu0
        %1097 = vdwg.mxu0
        %v1098 = vmul.f32 %v1095, 0.5
        %v1099 = vadd.f32 %v1098, %v198
        %v1101 = vadd.f32 %v461, %v728
        %v1102 = vmul.f32 %v1101, 0.5
        %1104 = vrot.lane.b32.xlu0 %v692, 64
        %v1105 = vpop.permute.xlu0 %1104
        %v1107 = vadd.f32 %v443, %v1105
        %v1108 = vmul.f32 %v1107, 0.5
        %1110 = vrot.lane.b32.xlu0 %v702, 64
        %v1111 = vpop.permute.xlu0 %1110
        %v1113 = vadd.f32 %v449, %v1111
        %v1114 = vmul.f32 %v1113, 0.5
        %1115 = vrot.lane.b32.xlu0 %v667, 64
        %v1116 = vpop.permute.xlu0 %1115
        %v1118 = vadd.f32 %v422, %v1116
        %v1119 = vmul.f32 %v1118, 0.5
        %1121 = vrot.lane.b32.xlu0 %v1102, 32
        %v1122 = vpop.permute.xlu0 %1121
        %1125 = vrot.lane.b32.xlu0 %v1108, 96
        %v1126 = vpop.permute.xlu0 %1125
        %1129 = vrot.lane.b32.xlu0 %v1119, 32
        %v1130 = vpop.permute.xlu0 %1129
        %v1132 = vsel %vm233, %v1122, %v1126
        %v1133 = vsel %vm333, %v1132, %v1114
        %v1134 = vsel %vm1024, %v1133, %v1130
        %1135 = vst.msk [vmem:[%s185] sm:$0xff] %vm200, %v1099
        %1136 = vst [vmem:[#allocation2] sm:$0xff] %v1134
        %p1137 = scmp.eq.s32.totalorder %s20, 7
        // Predicated region
        $region37: #{tpu_custom_call.1} parent=31 // pred_check
          %p1138 = pneg %p1137
        $region38: #{tpu_custom_call.1} parent=31 // pred_check_branch
          %1140 = sbr.rel (%p1138) target = $region40
        $region39: #{tpu_custom_call.1} parent=31 // pred_region
          %1141 = vst [vmem:[#allocation5] sm:$0xff] %v1134
        $region40: #{tpu_custom_call.1} parent=31 // pred_fallthru
          _
        %s1142 = sand.u32 %s96, 1
        %s1143 = scalar_lea.sflag [#allocation4], %s1142
        %s1144 = sand.u32 %s96, 1
        %s1145 = smul.addr %s1144, 8
        %s1146 = scalar_lea.vmem [#allocation3], %s1145
        // Predicated region
        $region41: #{tpu_custom_call.1} parent=31 // pred_check
          %p1147 = pneg %p106
        $region42: #{tpu_custom_call.1} parent=31 // pred_check_branch
          %1149 = sbr.rel (%p1147) target = $region44
        $region43: #{tpu_custom_call.1} parent=31 // pred_region
          %s1151 = ssub.s32 128, 128
          %1152 = vsyncadd %s1143, %s1151
          %s1153 = smul.addr %s20, 128
          %s1154 = scalar_lea.hbm %s3, %s1153
          %s1156 = sshll.u32 %s1146, 4
          %s1157 = int_to_ptr.vmem [resolvable:$true] %s1156
          %1159 = dma.vmem_to_hbm [thread:$0]  %s1157, 128, %s1154, %s1143
        $region44: #{tpu_custom_call.1} parent=31 // pred_fallthru
          _
        // Predicated region
        $region45: #{tpu_custom_call.1} parent=31 // pred_check
          %p1160 = pneg %p127
        $region46: #{tpu_custom_call.1} parent=31 // pred_check_branch
          %1162 = sbr.rel (%p1160) target = $region48
        $region47: #{tpu_custom_call.1} parent=31 // pred_region
          %s1164 = ssub.s32 128, 128
          %1165 = vsyncadd [#allocation6], %s1164
          %s1167 = sshll.u32 [#allocation5], 4
          %s1168 = int_to_ptr.vmem [resolvable:$true] %s1167
          %1170 = dma.vmem_to_hbm [thread:$0]  %s1168, 128, %s4, [#allocation6]
        $region48: #{tpu_custom_call.1} parent=31 // pred_fallthru
          _
        // Predicated region
        $region49: #{tpu_custom_call.1} parent=31 // pred_check
          %p1171 = pneg %p127
        $region50: #{tpu_custom_call.1} parent=31 // pred_check_branch
          %1173 = sbr.rel (%p1171) target = $region52
        $region51: #{tpu_custom_call.1} parent=31 // pred_region
          %1174 = dma.done [#allocation6], 128
        $region52: #{tpu_custom_call.1} parent=31 // pred_fallthru
          _
      $region32: #{tpu_custom_call.1} parent=5 // pred_fallthru
        _
      %p1175 = scmp.le.s32.totalorder 2, %s15
      // Predicated region
      $region53: #{tpu_custom_call.1} parent=5 // pred_check
        %p1176 = pneg %p1175
      $region54: #{tpu_custom_call.1} parent=5 // pred_check_branch
        %1178 = sbr.rel (%p1176) target = $region56
      $region55: #{tpu_custom_call.1} parent=5 // pred_region
        %s1179 = ssub.s32 %s15, 2
        // Predicated region
        $region57: #{tpu_custom_call.1} parent=55 // pred_check
          %p1180 = pneg %p112
        $region58: #{tpu_custom_call.1} parent=55 // pred_check_branch
          %1182 = sbr.rel (%p1180) target = $region60
        $region59: #{tpu_custom_call.1} parent=55 // pred_region
          %s1183 = sand.u32 %s97, 1
          %s1184 = scalar_lea.sflag [#allocation4], %s1183
          %s1185 = sand.u32 %s97, 1
          %s1186 = smul.addr %s1185, 8
          %s1187 = scalar_lea.vmem [#allocation3], %s1186
          %1188 = dma.done %s1184, 128
        $region60: #{tpu_custom_call.1} parent=55 // pred_fallthru
          _
      $region56: #{tpu_custom_call.1} parent=5 // pred_fallthru
        _
    $region6: #{tpu_custom_call.1} parent=1 // loop_footer
      %s19 = sadd.s32 1, %s15
    $region7: #{tpu_custom_call.1} parent=1 // loop_footer_branch
      %14 = sbr.rel target = $region3
    $region8: #{tpu_custom_call.1} parent=1 // loop_exit
      _
    %1189 = vsyncpa [#allocation4], 1
    %s1190 = scalar_lea.sflag [#allocation4], 1
    %1191 = vsyncpa %s1190, 1
    %1192 = vsyncpa [#allocation6], 1

</llo_original>
